<compile_context>
chip_gen: v7x
topology: tpu7x:2x2x1
jax: 0.10.0
libtpu: 0.0.40
codegen_flags: <defaults>
</compile_context>

<pallas_src>
from functools import partial

import jax
import jax.numpy as jnp
from jax.experimental import pallas as pl
from jax.experimental.pallas import tpu as pltpu


def _round_up(x, m):
    return (x + m - 1) // m * m


def _cdiv(a, b):
    return (a + b - 1) // b


def _pick_tb(B):
    """Batch tile: >=2 tiles for v7x megacore once B>16, 128-aligned M for larger B."""
    if B <= 16:
        return 16                                   # single tiny tile (bf16 sublane packed)
    if B <= 128:
        return _round_up(_cdiv(B, 2), 16)           # >=2 tiles, 16-row aligned
    return min(512, _round_up(_cdiv(B, 2), 128))    # 128-aligned M, >=2 tiles, cap 512


def mlp_kernel(x_ref, w1_ref, b1_ref, w2_ref, b2_ref, w3_ref, b3_ref, o_ref):
    # Layer 1: (TB, 784) bf16 @ (784, 512) bf16 -> f32 acc, bias + ReLU in f32.
    h1 = jnp.dot(x_ref[...], w1_ref[...], preferred_element_type=jnp.float32)
    h1 = jnp.maximum(h1 + b1_ref[...], 0.0).astype(jnp.bfloat16)
    # Layer 2: (TB, 512) @ (512, 512)
    h2 = jnp.dot(h1, w2_ref[...], preferred_element_type=jnp.float32)
    h2 = jnp.maximum(h2 + b2_ref[...], 0.0).astype(jnp.bfloat16)
    # Layer 3: (TB, 512) @ (512, 128)  (output N padded to 128, lane-dense store)
    logits = jnp.dot(h2, w3_ref[...], preferred_element_type=jnp.float32)
    o_ref[...] = (logits + b3_ref[...]).astype(o_ref.dtype)


def prepare_params(params, n_pad=128):
    """One-time parameter prep (hoisted out of the per-call path).

    Casts weights to bf16 and pads the last layer's output dim to 128 so the
    kernel stores a lane-dense tile. Call once, reuse across inferences.
    """
    w1, b1, w2, b2, w3, b3 = params               # stored (in_features, out_features)
    n_out = w3.shape[1]
    w1p = w1.astype(jnp.bfloat16)                 # (784, 512), no K padding
    w2p = w2.astype(jnp.bfloat16)                 # (512, 512)
    w3p = jnp.zeros((w3.shape[0], n_pad), jnp.bfloat16).at[:, :n_out].set(
        w3.astype(jnp.bfloat16))
    b1p = b1.reshape(1, -1).astype(jnp.float32)
    b2p = b2.reshape(1, -1).astype(jnp.float32)
    b3p = jnp.zeros((1, n_pad), jnp.float32).at[:, :n_out].set(
        b3.reshape(1, -1).astype(jnp.float32))
    return (w1p, b1p, w2p, b2p, w3p, b3p)


@partial(jax.jit, static_argnames=("n_out",))
def neural_network_forward(x, prepped, n_out=10):
    """x: (B, 1, 28, 28) float32 (NCHW, like PyTorch). Returns (B, n_out) f32 logits."""
    w1p, b1p, w2p, b2p, w3p, b3p = prepped
    B = x.shape[0]
    K, H1 = w1p.shape                            # 784, 512
    H2 = w2p.shape[1]                            # 512
    N_pad = w3p.shape[1]                         # 128

    # nn.Flatten() + bf16 cast (single pass over x; no zeros+set round trip).
    x_flat = x.reshape(B, -1).astype(jnp.bfloat16)

    TB = _pick_tb(B)
    B_pad = _round_up(B, TB)
    if B_pad > B:
        x_flat = jnp.pad(x_flat, ((0, B_pad - B), (0, 0)))
    grid = (B_pad // TB,)

    x_spec = pl.BlockSpec((TB, K), lambda i: (i, 0))
    out_spec = pl.BlockSpec((TB, N_pad), lambda i: (i, 0))
    # Constant index_map -> weights stay VMEM-resident across grid steps.
    # NOTE: could add pipeline_mode=pl.Buffered(1) to drop the unused second
    # buffer; omitted for broad jax-version compatibility (VMEM is not tight).
    resident = lambda shape: pl.BlockSpec(shape, lambda i: (0, 0))

    flops = 2 * B_pad * (K * H1 + H1 * H2 + H2 * N_pad)
    bytes_accessed = (
        B_pad * K * 2                                   # x (bf16)
        + (K * H1 + H1 * H2 + H2 * N_pad) * 2           # weights (bf16)
        + (H1 + H2 + N_pad) * 4                         # biases (f32)
        + B_pad * N_pad * 4                             # output (f32)
    )

    out = pl.pallas_call(
        mlp_kernel,
        out_shape=jax.ShapeDtypeStruct((B_pad, N_pad), jnp.float32),
        grid=grid,
        in_specs=[
            x_spec,                                     # x tile (streams over batch)
            resident((K, H1)), resident((1, H1)),       # w1, b1
            resident((H1, H2)), resident((1, H2)),      # w2, b2
            resident((H2, N_pad)), resident((1, N_pad)),  # w3, b3 (N padded)
        ],
        out_specs=out_spec,
        compiler_params=pltpu.CompilerParams(
            dimension_semantics=("parallel",),
            vmem_limit_bytes=32 * 1024 * 1024,
        ),
        cost_estimate=pl.CostEstimate(
            flops=flops, transcendentals=0, bytes_accessed=bytes_accessed),
    )(x_flat, w1p, b1p, w2p, b2p, w3p, b3p)

    return out[:B, :n_out]


def init_params(key):
    """Deterministic init mirroring nn.Linear shapes (stored transposed: (in, out))."""
    ks = jax.random.split(key, 6)

    def linear(kw, kb, fan_in, fan_out):
        bound = 1.0 / jnp.sqrt(fan_in)
        w = jax.random.uniform(kw, (fan_in, fan_out), jnp.float32, -bound, bound)
        b = jax.random.uniform(kb, (1, fan_out), jnp.float32, -bound, bound)
        return w, b

    w1, b1 = linear(ks[0], ks[1], 28 * 28, 512)
    w2, b2 = linear(ks[2], ks[3], 512, 512)
    w3, b3 = linear(ks[4], ks[5], 512, 10)
    return (w1, b1, w2, b2, w3, b3)


if __name__ == "__main__":
    key = jax.random.PRNGKey(0)
    k_params, k_x = jax.random.split(key)

    params = init_params(k_params)
    prepped = prepare_params(params)   # one-time weight prep (hoisted out of forward)

    # Small MNIST-like batch: (B, C, H, W) = (4, 1, 28, 28)
    x = jax.random.normal(k_x, (4, 1, 28, 28), dtype=jnp.float32)

    logits = neural_network_forward(x, prepped)
    jax.block_until_ready(logits)
    assert logits.shape == (4, 10)

    # Reference in plain JAX with the same bf16-weight / f32-accumulate recipe.
    w1, b1, w2, b2, w3, b3 = params
    xf = x.reshape(x.shape[0], -1).astype(jnp.bfloat16)
    h = jnp.dot(xf, w1.astype(jnp.bfloat16), preferred_element_type=jnp.float32)
    h = jnp.maximum(h + b1, 0.0).astype(jnp.bfloat16)
    h = jnp.dot(h, w2.astype(jnp.bfloat16), preferred_element_type=jnp.float32)
    h = jnp.maximum(h + b2, 0.0).astype(jnp.bfloat16)
    ref = jnp.dot(h, w3.astype(jnp.bfloat16), preferred_element_type=jnp.float32) + b3
    assert jnp.allclose(logits, ref, atol=2e-2, rtol=2e-2), (
        float(jnp.max(jnp.abs(logits - ref))))

    # Sanity check vs full-f32 math (looser tolerance, bf16 quantization error only).
    rf = jnp.maximum(x.reshape(x.shape[0], -1) @ w1 + b1, 0.0)
    rf = jnp.maximum(rf @ w2 + b2, 0.0)
    rf = rf @ w3 + b3
    assert jnp.allclose(logits, rf, atol=2e-1, rtol=2e-1)

    print("KERNEL_OK")
</pallas_src>

<mosaic_0001>
module attributes {stable_mosaic.version = 11 : i64} {
  func.func @mlp_kernel(%arg0: i32, %arg1: memref<16x784xbf16, #tpu.memory_space<vmem>>, %arg2: memref<784x512xbf16, #tpu.memory_space<vmem>>, %arg3: memref<1x512xf32, #tpu.memory_space<vmem>>, %arg4: memref<512x512xbf16, #tpu.memory_space<vmem>>, %arg5: memref<1x512xf32, #tpu.memory_space<vmem>>, %arg6: memref<512x128xbf16, #tpu.memory_space<vmem>>, %arg7: memref<1x128xf32, #tpu.memory_space<vmem>>, %arg8: memref<16x128xf32, #tpu.memory_space<vmem>>) attributes {dimension_semantics = [#tpu.dimension_semantics<parallel>], iteration_bounds = array<i64: 1>, scalar_prefetch = 0 : i64, scratch_operands = 0 : i64, tpu.core_type = #tpu.core_type<tc>, window_params = [{transform_indices = @transform_0, window_bounds = array<i64: 16, 784>}, {pipeline_mode = #tpu.pipeline_mode<synchronous>, transform_indices = @transform_1, window_bounds = array<i64: 784, 512>}, {pipeline_mode = #tpu.pipeline_mode<synchronous>, transform_indices = @transform_2, window_bounds = array<i64: 1, 512>}, {pipeline_mode = #tpu.pipeline_mode<synchronous>, transform_indices = @transform_3, window_bounds = array<i64: 512, 512>}, {pipeline_mode = #tpu.pipeline_mode<synchronous>, transform_indices = @transform_4, window_bounds = array<i64: 1, 512>}, {pipeline_mode = #tpu.pipeline_mode<synchronous>, transform_indices = @transform_5, window_bounds = array<i64: 512, 128>}, {pipeline_mode = #tpu.pipeline_mode<synchronous>, transform_indices = @transform_6, window_bounds = array<i64: 1, 128>}, {transform_indices = @transform_7, window_bounds = array<i64: 16, 128>}]} {
    %c0 = arith.constant 0 : index
    %c0_0 = arith.constant 0 : index
    %0 = vector.load %arg1[%c0, %c0_0] : memref<16x784xbf16, #tpu.memory_space<vmem>>, vector<16x784xbf16>
    %c0_1 = arith.constant 0 : index
    %c0_2 = arith.constant 0 : index
    %1 = vector.load %arg2[%c0_1, %c0_2] : memref<784x512xbf16, #tpu.memory_space<vmem>>, vector<784x512xbf16>
    %cst = arith.constant dense<0.000000e+00> : vector<16x512xf32>
    %2 = tpu.matmul %0, %1, %cst {dimension_numbers = #tpu.dot_dimension_numbers<[1], [0], [0], [1], [0, 0, 1, 1], [], []>} : vector<16x784xbf16>, vector<784x512xbf16>, vector<16x512xf32> -> vector<16x512xf32>
    %c0_3 = arith.constant 0 : index
    %c0_4 = arith.constant 0 : index
    %3 = vector.load %arg3[%c0_3, %c0_4] : memref<1x512xf32, #tpu.memory_space<vmem>>, vector<1x512xf32>
    %4 = vector.broadcast %3 : vector<1x512xf32> to vector<16x512xf32>
    %5 = arith.addf %2, %4 : vector<16x512xf32>
    %cst_5 = arith.constant 0.000000e+00 : f32
    %6 = vector.broadcast %cst_5 : f32 to vector<16x512xf32>
    %7 = arith.maximumf %5, %6 : vector<16x512xf32>
    %8 = arith.truncf %7 : vector<16x512xf32> to vector<16x512xbf16>
    %c0_6 = arith.constant 0 : index
    %c0_7 = arith.constant 0 : index
    %9 = vector.load %arg4[%c0_6, %c0_7] : memref<512x512xbf16, #tpu.memory_space<vmem>>, vector<512x512xbf16>
    %cst_8 = arith.constant dense<0.000000e+00> : vector<16x512xf32>
    %10 = tpu.matmul %8, %9, %cst_8 {dimension_numbers = #tpu.dot_dimension_numbers<[1], [0], [0], [1], [0, 0, 1, 1], [], []>} : vector<16x512xbf16>, vector<512x512xbf16>, vector<16x512xf32> -> vector<16x512xf32>
    %c0_9 = arith.constant 0 : index
    %c0_10 = arith.constant 0 : index
    %11 = vector.load %arg5[%c0_9, %c0_10] : memref<1x512xf32, #tpu.memory_space<vmem>>, vector<1x512xf32>
    %12 = vector.broadcast %11 : vector<1x512xf32> to vector<16x512xf32>
    %13 = arith.addf %10, %12 : vector<16x512xf32>
    %cst_11 = arith.constant 0.000000e+00 : f32
    %14 = vector.broadcast %cst_11 : f32 to vector<16x512xf32>
    %15 = arith.maximumf %13, %14 : vector<16x512xf32>
    %16 = arith.truncf %15 : vector<16x512xf32> to vector<16x512xbf16>
    %c0_12 = arith.constant 0 : index
    %c0_13 = arith.constant 0 : index
    %17 = vector.load %arg6[%c0_12, %c0_13] : memref<512x128xbf16, #tpu.memory_space<vmem>>, vector<512x128xbf16>
    %cst_14 = arith.constant dense<0.000000e+00> : vector<16x128xf32>
    %18 = tpu.matmul %16, %17, %cst_14 {dimension_numbers = #tpu.dot_dimension_numbers<[1], [0], [0], [1], [0, 0, 1, 1], [], []>} : vector<16x512xbf16>, vector<512x128xbf16>, vector<16x128xf32> -> vector<16x128xf32>
    %c0_15 = arith.constant 0 : index
    %c0_16 = arith.constant 0 : index
    %19 = vector.load %arg7[%c0_15, %c0_16] : memref<1x128xf32, #tpu.memory_space<vmem>>, vector<1x128xf32>
    %20 = vector.broadcast %19 : vector<1x128xf32> to vector<16x128xf32>
    %21 = arith.addf %18, %20 : vector<16x128xf32>
    %c0_17 = arith.constant 0 : index
    %c0_18 = arith.constant 0 : index
    %22 = vector.load %arg8[%c0_17, %c0_18] : memref<16x128xf32, #tpu.memory_space<vmem>>, vector<16x128xf32>
    tpu.vector_store %arg8[%c0_17, %c0_18], %21 {strides = array<i32>} : memref<16x128xf32, #tpu.memory_space<vmem>>, vector<16x128xf32>,
    return
  }
  func.func @transform_0(%arg0: i32) -> (i32, i32) {
    %c0_i32 = arith.constant 0 : i32
    %c0_i32_0 = arith.constant 0 : i32
    return %arg0, %c0_i32 : i32, i32
  }
  func.func @transform_1(%arg0: i32) -> (i32, i32) {
    %c0_i32 = arith.constant 0 : i32
    %c0_i32_0 = arith.constant 0 : i32
    %c0_i32_1 = arith.constant 0 : i32
    return %c0_i32, %c0_i32_0 : i32, i32
  }
  func.func @transform_2(%arg0: i32) -> (i32, i32) {
    %c0_i32 = arith.constant 0 : i32
    %c0_i32_0 = arith.constant 0 : i32
    %c0_i32_1 = arith.constant 0 : i32
    return %c0_i32, %c0_i32_0 : i32, i32
  }
  func.func @transform_3(%arg0: i32) -> (i32, i32) {
    %c0_i32 = arith.constant 0 : i32
    %c0_i32_0 = arith.constant 0 : i32
    %c0_i32_1 = arith.constant 0 : i32
    return %c0_i32, %c0_i32_0 : i32, i32
  }
  func.func @transform_4(%arg0: i32) -> (i32, i32) {
    %c0_i32 = arith.constant 0 : i32
    %c0_i32_0 = arith.constant 0 : i32
    %c0_i32_1 = arith.constant 0 : i32
    return %c0_i32, %c0_i32_0 : i32, i32
  }
  func.func @transform_5(%arg0: i32) -> (i32, i32) {
    %c0_i32 = arith.constant 0 : i32
    %c0_i32_0 = arith.constant 0 : i32
    %c0_i32_1 = arith.constant 0 : i32
    return %c0_i32, %c0_i32_0 : i32, i32
  }
  func.func @transform_6(%arg0: i32) -> (i32, i32) {
    %c0_i32 = arith.constant 0 : i32
    %c0_i32_0 = arith.constant 0 : i32
    %c0_i32_1 = arith.constant 0 : i32
    return %c0_i32, %c0_i32_0 : i32, i32
  }
  func.func @transform_7(%arg0: i32) -> (i32, i32) {
    %c0_i32 = arith.constant 0 : i32
    %c0_i32_0 = arith.constant 0 : i32
    return %arg0, %c0_i32 : i32, i32
  }
}

</mosaic_0001>

<llo_original>
// kernel: neural_network_forward.1
$region0: #{neural_network_forward.1}
  #allocation0 [shape = 'u32[]', space=smem, size = 0x4, offset = 0x4, fixed_abs, tag = 'smem constant byte address 0x4 - core index']
  #allocation1 [shape = 'u32[144,128]{1,0:T(1,128)}', space=vmem, size = 0x12000, scoped, tag = 'internal scratch']
  %s0 = inlined_call_operand.vmem [shape: bf16[16,784], index: 0, kind: input, shape index: {}]
  %s1 = inlined_call_operand.hbm [shape: bf16[784,512], index: 1, kind: input, shape index: {}]
  %s2 = inlined_call_operand.vmem [shape: f32[1,512], index: 2, kind: input, shape index: {}]
  %s3 = inlined_call_operand.hbm [shape: bf16[512,512], index: 3, kind: input, shape index: {}]
  %s4 = inlined_call_operand.vmem [shape: f32[1,512], index: 4, kind: input, shape index: {}]
  %s5 = inlined_call_operand.vmem [shape: bf16[512,128], index: 5, kind: input, shape index: {}]
  %s6 = inlined_call_operand.vmem [shape: f32[1,128], index: 6, kind: input, shape index: {}]
  %s7 = inlined_call_operand.vmem [shape: f32[16,128], index: 7, kind: output, shape index: {}]
  %s8 = sld [smem:[#allocation0]]
  $region46: #{neural_network_forward.1} parent=0
    _
  %s10 = ssub.s32 1, %s8
  %s11 = scalar_select 0, %s10, %s8
  $region1: #{neural_network_forward.1} parent=0
    #allocation2 [shape = 'u8[802816]{0}', space=vmem, size = 0xc4000, scoped, tag = 'input window, operand 1, single buffered']
    #allocation3 [shape = 's32[1]{0}', space=sflag, size = 0x4, scoped, tag = 'scoped memory for neural_network_forward.1']
    #allocation4 [shape = 'u8[524288]{0}', space=vmem, size = 0x80000, scoped, tag = 'input window, operand 3, single buffered']
    #allocation5 [shape = 's32[1]{0}', space=sflag, size = 0x4, scoped, tag = 'scoped memory for neural_network_forward.1']
    %12 = vsyncpa [#allocation3], 0
    %13 = vsyncpa [#allocation5], 0
    // Predicated region
    $region2: #{neural_network_forward.1} parent=1 // pred_check
      _
    $region3: #{neural_network_forward.1} parent=1 // pred_check_branch
      %15 = sbr.rel (0) target = $region5
    $region4: #{neural_network_forward.1} parent=1 // pred_region
      _
    $region5: #{neural_network_forward.1} parent=1 // pred_fallthru
      _
    // Predicated region
    $region6: #{neural_network_forward.1} parent=1 // pred_check
      _
    $region7: #{neural_network_forward.1} parent=1 // pred_check_branch
      %17 = sbr.rel (0) target = $region9
    $region8: #{neural_network_forward.1} parent=1 // pred_region
      %s19 = ssub.s32 25088, 25088
      %20 = vsyncadd [#allocation3], %s19
      %s21 = sshll.u32 [#allocation2], 4
      %s22 = int_to_ptr.vmem [resolvable:$true] %s21
      %27 = dma.hbm_to_vmem [thread:$0]  %s1, 25088, %s22, [#allocation3], 256, 256, 16
    $region9: #{neural_network_forward.1} parent=1 // pred_fallthru
      _
    // Predicated region
    $region10: #{neural_network_forward.1} parent=1 // pred_check
      _
    $region11: #{neural_network_forward.1} parent=1 // pred_check_branch
      %29 = sbr.rel (0) target = $region13
    $region12: #{neural_network_forward.1} parent=1 // pred_region
      _
    $region13: #{neural_network_forward.1} parent=1 // pred_fallthru
      _
    // Predicated region
    $region14: #{neural_network_forward.1} parent=1 // pred_check
      _
    $region15: #{neural_network_forward.1} parent=1 // pred_check_branch
      %31 = sbr.rel (0) target = $region17
    $region16: #{neural_network_forward.1} parent=1 // pred_region
      %s33 = ssub.s32 16384, 16384
      %34 = vsyncadd [#allocation5], %s33
      %s35 = sshll.u32 [#allocation4], 4
      %s36 = int_to_ptr.vmem [resolvable:$true] %s35
      %41 = dma.hbm_to_vmem [thread:$0]  %s3, 16384, %s36, [#allocation5], 256, 256, 16
    $region17: #{neural_network_forward.1} parent=1 // pred_fallthru
      _
    // Predicated region
    $region18: #{neural_network_forward.1} parent=1 // pred_check
      _
    $region19: #{neural_network_forward.1} parent=1 // pred_check_branch
      %43 = sbr.rel (0) target = $region21
    $region20: #{neural_network_forward.1} parent=1 // pred_region
      _
    $region21: #{neural_network_forward.1} parent=1 // pred_fallthru
      _
    // Predicated region
    $region22: #{neural_network_forward.1} parent=1 // pred_check
      _
    $region23: #{neural_network_forward.1} parent=1 // pred_check_branch
      %45 = sbr.rel (0) target = $region25
    $region24: #{neural_network_forward.1} parent=1 // pred_region
      _
    $region25: #{neural_network_forward.1} parent=1 // pred_fallthru
      _
    // Predicated region
    $region26: #{neural_network_forward.1} parent=1 // pred_check
      _
    $region27: #{neural_network_forward.1} parent=1 // pred_check_branch
      %47 = sbr.rel (0) target = $region29
    $region28: #{neural_network_forward.1} parent=1 // pred_region
      _
    $region29: #{neural_network_forward.1} parent=1 // pred_fallthru
      _
    // Predicated region
    $region30: #{neural_network_forward.1} parent=1 // pred_check
      _
    $region31: #{neural_network_forward.1} parent=1 // pred_check_branch
      %49 = sbr.rel (0) target = $region33
    $region32: #{neural_network_forward.1} parent=1 // pred_region
      %50 = dma.done [#allocation3], 25088
    $region33: #{neural_network_forward.1} parent=1 // pred_fallthru
      _
    // Predicated region
    $region34: #{neural_network_forward.1} parent=1 // pred_check
      _
    $region35: #{neural_network_forward.1} parent=1 // pred_check_branch
      %52 = sbr.rel (0) target = $region37
    $region36: #{neural_network_forward.1} parent=1 // pred_region
      %53 = dma.done [#allocation5], 16384
    $region37: #{neural_network_forward.1} parent=1 // pred_fallthru
      _
    %v55 = vld [vmem:[%s0] sm:$0xff]
    %v56 = vld [vmem:[%s0 + $0x8] sm:$0xff]
    %v57 = vld [vmem:[%s0 + $0x10] sm:$0xff]
    %v58 = vld [vmem:[%s0 + $0x18] sm:$0xf]
    %v59 = vld [vmem:[%s0 + $0x1c] sm:$0xff]
    %v60 = vld [vmem:[%s0 + $0x24] sm:$0xff]
    %v61 = vld [vmem:[%s0 + $0x2c] sm:$0xff]
    %v62 = vld [vmem:[%s0 + $0x34] sm:$0xf]
    %v63 = vld [vmem:[#allocation2] sm:$0xff]
    %v64 = vld [vmem:[#allocation2 + $0x8] sm:$0xff]
    %v65 = vld [vmem:[#allocation2 + $0x10] sm:$0xff]
    %v66 = vld [vmem:[#allocation2 + $0x18] sm:$0xff]
    %v67 = vld [vmem:[#allocation2 + $0x20] sm:$0xff]
    %v68 = vld [vmem:[#allocation2 + $0x28] sm:$0xff]
    %v69 = vld [vmem:[#allocation2 + $0x30] sm:$0xff]
    %v70 = vld [vmem:[#allocation2 + $0x38] sm:$0xff]
    %v71 = vld [vmem:[#allocation2 + $0x40] sm:$0xff]
    %v72 = vld [vmem:[#allocation2 + $0x48] sm:$0xff]
    %v73 = vld [vmem:[#allocation2 + $0x50] sm:$0xff]
    %v74 = vld [vmem:[#allocation2 + $0x58] sm:$0xff]
    %v75 = vld [vmem:[#allocation2 + $0x60] sm:$0xff]
    %v76 = vld [vmem:[#allocation2 + $0x68] sm:$0xff]
    %v77 = vld [vmem:[#allocation2 + $0x70] sm:$0xff]
    %v78 = vld [vmem:[#allocation2 + $0x78] sm:$0xff]
    %v79 = vld [vmem:[#allocation2 + $0x80] sm:$0xff]
    %v80 = vld [vmem:[#allocation2 + $0x88] sm:$0xff]
    %v81 = vld [vmem:[#allocation2 + $0x90] sm:$0xff]
    %v82 = vld [vmem:[#allocation2 + $0x98] sm:$0xff]
    %v83 = vld [vmem:[#allocation2 + $0xa0] sm:$0xff]
    %v84 = vld [vmem:[#allocation2 + $0xa8] sm:$0xff]
    %v85 = vld [vmem:[#allocation2 + $0xb0] sm:$0xff]
    %v86 = vld [vmem:[#allocation2 + $0xb8] sm:$0xff]
    %v87 = vld [vmem:[#allocation2 + $0xc0] sm:$0xff]
    %v88 = vld [vmem:[#allocation2 + $0xc8] sm:$0xff]
    %v89 = vld [vmem:[#allocation2 + $0xd0] sm:$0xff]
    %v90 = vld [vmem:[#allocation2 + $0xd8] sm:$0xff]
    %v91 = vld [vmem:[#allocation2 + $0xe0] sm:$0xff]
    %v92 = vld [vmem:[#allocation2 + $0xe8] sm:$0xff]
    %v93 = vld [vmem:[#allocation2 + $0xf0] sm:$0xff]
    %v94 = vld [vmem:[#allocation2 + $0xf8] sm:$0xff]
    %v95 = vld [vmem:[#allocation2 + $0x100] sm:$0xff]
    %v96 = vld [vmem:[#allocation2 + $0x108] sm:$0xff]
    %v97 = vld [vmem:[#allocation2 + $0x110] sm:$0xff]
    %v98 = vld [vmem:[#allocation2 + $0x118] sm:$0xff]
    %v99 = vld [vmem:[#allocation2 + $0x120] sm:$0xff]
    %v100 = vld [vmem:[#allocation2 + $0x128] sm:$0xff]
    %v101 = vld [vmem:[#allocation2 + $0x130] sm:$0xff]
    %v102 = vld [vmem:[#allocation2 + $0x138] sm:$0xff]
    %v103 = vld [vmem:[#allocation2 + $0x140] sm:$0xff]
    %v104 = vld [vmem:[#allocation2 + $0x148] sm:$0xff]
    %v105 = vld [vmem:[#allocation2 + $0x150] sm:$0xff]
    %v106 = vld [vmem:[#allocation2 + $0x158] sm:$0xff]
    %v107 = vld [vmem:[#allocation2 + $0x160] sm:$0xff]
    %v108 = vld [vmem:[#allocation2 + $0x168] sm:$0xff]
    %v109 = vld [vmem:[#allocation2 + $0x170] sm:$0xff]
    %v110 = vld [vmem:[#allocation2 + $0x178] sm:$0xff]
    %v111 = vld [vmem:[#allocation2 + $0x180] sm:$0xff]
    %v112 = vld [vmem:[#allocation2 + $0x188] sm:$0xff]
    %v113 = vld [vmem:[#allocation2 + $0x190] sm:$0xff]
    %v114 = vld [vmem:[#allocation2 + $0x198] sm:$0xff]
    %v115 = vld [vmem:[#allocation2 + $0x1a0] sm:$0xff]
    %v116 = vld [vmem:[#allocation2 + $0x1a8] sm:$0xff]
    %v117 = vld [vmem:[#allocation2 + $0x1b0] sm:$0xff]
    %v118 = vld [vmem:[#allocation2 + $0x1b8] sm:$0xff]
    %v119 = vld [vmem:[#allocation2 + $0x1c0] sm:$0xff]
    %v120 = vld [vmem:[#allocation2 + $0x1c8] sm:$0xff]
    %v121 = vld [vmem:[#allocation2 + $0x1d0] sm:$0xff]
    %v122 = vld [vmem:[#allocation2 + $0x1d8] sm:$0xff]
    %v123 = vld [vmem:[#allocation2 + $0x1e0] sm:$0xff]
    %v124 = vld [vmem:[#allocation2 + $0x1e8] sm:$0xff]
    %v125 = vld [vmem:[#allocation2 + $0x1f0] sm:$0xff]
    %v126 = vld [vmem:[#allocation2 + $0x1f8] sm:$0xff]
    %v127 = vld [vmem:[#allocation2 + $0x200] sm:$0xff]
    %v128 = vld [vmem:[#allocation2 + $0x208] sm:$0xff]
    %v129 = vld [vmem:[#allocation2 + $0x210] sm:$0xff]
    %v130 = vld [vmem:[#allocation2 + $0x218] sm:$0xff]
    %v131 = vld [vmem:[#allocation2 + $0x220] sm:$0xff]
    %v132 = vld [vmem:[#allocation2 + $0x228] sm:$0xff]
    %v133 = vld [vmem:[#allocation2 + $0x230] sm:$0xff]
    %v134 = vld [vmem:[#allocation2 + $0x238] sm:$0xff]
    %v135 = vld [vmem:[#allocation2 + $0x240] sm:$0xff]
    %v136 = vld [vmem:[#allocation2 + $0x248] sm:$0xff]
    %v137 = vld [vmem:[#allocation2 + $0x250] sm:$0xff]
    %v138 = vld [vmem:[#allocation2 + $0x258] sm:$0xff]
    %v139 = vld [vmem:[#allocation2 + $0x260] sm:$0xff]
    %v140 = vld [vmem:[#allocation2 + $0x268] sm:$0xff]
    %v141 = vld [vmem:[#allocation2 + $0x270] sm:$0xff]
    %v142 = vld [vmem:[#allocation2 + $0x278] sm:$0xff]
    %v143 = vld [vmem:[#allocation2 + $0x280] sm:$0xff]
    %v144 = vld [vmem:[#allocation2 + $0x288] sm:$0xff]
    %v145 = vld [vmem:[#allocation2 + $0x290] sm:$0xff]
    %v146 = vld [vmem:[#allocation2 + $0x298] sm:$0xff]
    %v147 = vld [vmem:[#allocation2 + $0x2a0] sm:$0xff]
    %v148 = vld [vmem:[#allocation2 + $0x2a8] sm:$0xff]
    %v149 = vld [vmem:[#allocation2 + $0x2b0] sm:$0xff]
    %v150 = vld [vmem:[#allocation2 + $0x2b8] sm:$0xff]
    %v151 = vld [vmem:[#allocation2 + $0x2c0] sm:$0xff]
    %v152 = vld [vmem:[#allocation2 + $0x2c8] sm:$0xff]
    %v153 = vld [vmem:[#allocation2 + $0x2d0] sm:$0xff]
    %v154 = vld [vmem:[#allocation2 + $0x2d8] sm:$0xff]
    %v155 = vld [vmem:[#allocation2 + $0x2e0] sm:$0xff]
    %v156 = vld [vmem:[#allocation2 + $0x2e8] sm:$0xff]
    %v157 = vld [vmem:[#allocation2 + $0x2f0] sm:$0xff]
    %v158 = vld [vmem:[#allocation2 + $0x2f8] sm:$0xff]
    %v159 = vld [vmem:[#allocation2 + $0x300] sm:$0xff]
    %v160 = vld [vmem:[#allocation2 + $0x308] sm:$0xff]
    %v161 = vld [vmem:[#allocation2 + $0x310] sm:$0xff]
    %v162 = vld [vmem:[#allocation2 + $0x318] sm:$0xff]
    %v163 = vld [vmem:[#allocation2 + $0x320] sm:$0xff]
    %v164 = vld [vmem:[#allocation2 + $0x328] sm:$0xff]
    %v165 = vld [vmem:[#allocation2 + $0x330] sm:$0xff]
    %v166 = vld [vmem:[#allocation2 + $0x338] sm:$0xff]
    %v167 = vld [vmem:[#allocation2 + $0x340] sm:$0xff]
    %v168 = vld [vmem:[#allocation2 + $0x348] sm:$0xff]
    %v169 = vld [vmem:[#allocation2 + $0x350] sm:$0xff]
    %v170 = vld [vmem:[#allocation2 + $0x358] sm:$0xff]
    %v171 = vld [vmem:[#allocation2 + $0x360] sm:$0xff]
    %v172 = vld [vmem:[#allocation2 + $0x368] sm:$0xff]
    %v173 = vld [vmem:[#allocation2 + $0x370] sm:$0xff]
    %v174 = vld [vmem:[#allocation2 + $0x378] sm:$0xff]
    %v175 = vld [vmem:[#allocation2 + $0x380] sm:$0xff]
    %v176 = vld [vmem:[#allocation2 + $0x388] sm:$0xff]
    %v177 = vld [vmem:[#allocation2 + $0x390] sm:$0xff]
    %v178 = vld [vmem:[#allocation2 + $0x398] sm:$0xff]
    %v179 = vld [vmem:[#allocation2 + $0x3a0] sm:$0xff]
    %v180 = vld [vmem:[#allocation2 + $0x3a8] sm:$0xff]
    %v181 = vld [vmem:[#allocation2 + $0x3b0] sm:$0xff]
    %v182 = vld [vmem:[#allocation2 + $0x3b8] sm:$0xff]
    %v183 = vld [vmem:[#allocation2 + $0x3c0] sm:$0xff]
    %v184 = vld [vmem:[#allocation2 + $0x3c8] sm:$0xff]
    %v185 = vld [vmem:[#allocation2 + $0x3d0] sm:$0xff]
    %v186 = vld [vmem:[#allocation2 + $0x3d8] sm:$0xff]
    %v187 = vld [vmem:[#allocation2 + $0x3e0] sm:$0xff]
    %v188 = vld [vmem:[#allocation2 + $0x3e8] sm:$0xff]
    %v189 = vld [vmem:[#allocation2 + $0x3f0] sm:$0xff]
    %v190 = vld [vmem:[#allocation2 + $0x3f8] sm:$0xff]
    %v191 = vld [vmem:[#allocation2 + $0x400] sm:$0xff]
    %v192 = vld [vmem:[#allocation2 + $0x408] sm:$0xff]
    %v193 = vld [vmem:[#allocation2 + $0x410] sm:$0xff]
    %v194 = vld [vmem:[#allocation2 + $0x418] sm:$0xff]
    %v195 = vld [vmem:[#allocation2 + $0x420] sm:$0xff]
    %v196 = vld [vmem:[#allocation2 + $0x428] sm:$0xff]
    %v197 = vld [vmem:[#allocation2 + $0x430] sm:$0xff]
    %v198 = vld [vmem:[#allocation2 + $0x438] sm:$0xff]
    %v199 = vld [vmem:[#allocation2 + $0x440] sm:$0xff]
    %v200 = vld [vmem:[#allocation2 + $0x448] sm:$0xff]
    %v201 = vld [vmem:[#allocation2 + $0x450] sm:$0xff]
    %v202 = vld [vmem:[#allocation2 + $0x458] sm:$0xff]
    %v203 = vld [vmem:[#allocation2 + $0x460] sm:$0xff]
    %v204 = vld [vmem:[#allocation2 + $0x468] sm:$0xff]
    %v205 = vld [vmem:[#allocation2 + $0x470] sm:$0xff]
    %v206 = vld [vmem:[#allocation2 + $0x478] sm:$0xff]
    %v207 = vld [vmem:[#allocation2 + $0x480] sm:$0xff]
    %v208 = vld [vmem:[#allocation2 + $0x488] sm:$0xff]
    %v209 = vld [vmem:[#allocation2 + $0x490] sm:$0xff]
    %v210 = vld [vmem:[#allocation2 + $0x498] sm:$0xff]
    %v211 = vld [vmem:[#allocation2 + $0x4a0] sm:$0xff]
    %v212 = vld [vmem:[#allocation2 + $0x4a8] sm:$0xff]
    %v213 = vld [vmem:[#allocation2 + $0x4b0] sm:$0xff]
    %v214 = vld [vmem:[#allocation2 + $0x4b8] sm:$0xff]
    %v215 = vld [vmem:[#allocation2 + $0x4c0] sm:$0xff]
    %v216 = vld [vmem:[#allocation2 + $0x4c8] sm:$0xff]
    %v217 = vld [vmem:[#allocation2 + $0x4d0] sm:$0xff]
    %v218 = vld [vmem:[#allocation2 + $0x4d8] sm:$0xff]
    %v219 = vld [vmem:[#allocation2 + $0x4e0] sm:$0xff]
    %v220 = vld [vmem:[#allocation2 + $0x4e8] sm:$0xff]
    %v221 = vld [vmem:[#allocation2 + $0x4f0] sm:$0xff]
    %v222 = vld [vmem:[#allocation2 + $0x4f8] sm:$0xff]
    %v223 = vld [vmem:[#allocation2 + $0x500] sm:$0xff]
    %v224 = vld [vmem:[#allocation2 + $0x508] sm:$0xff]
    %v225 = vld [vmem:[#allocation2 + $0x510] sm:$0xff]
    %v226 = vld [vmem:[#allocation2 + $0x518] sm:$0xff]
    %v227 = vld [vmem:[#allocation2 + $0x520] sm:$0xff]
    %v228 = vld [vmem:[#allocation2 + $0x528] sm:$0xff]
    %v229 = vld [vmem:[#allocation2 + $0x530] sm:$0xff]
    %v230 = vld [vmem:[#allocation2 + $0x538] sm:$0xff]
    %v231 = vld [vmem:[#allocation2 + $0x540] sm:$0xff]
    %v232 = vld [vmem:[#allocation2 + $0x548] sm:$0xff]
    %v233 = vld [vmem:[#allocation2 + $0x550] sm:$0xff]
    %v234 = vld [vmem:[#allocation2 + $0x558] sm:$0xff]
    %v235 = vld [vmem:[#allocation2 + $0x560] sm:$0xff]
    %v236 = vld [vmem:[#allocation2 + $0x568] sm:$0xff]
    %v237 = vld [vmem:[#allocation2 + $0x570] sm:$0xff]
    %v238 = vld [vmem:[#allocation2 + $0x578] sm:$0xff]
    %v239 = vld [vmem:[#allocation2 + $0x580] sm:$0xff]
    %v240 = vld [vmem:[#allocation2 + $0x588] sm:$0xff]
    %v241 = vld [vmem:[#allocation2 + $0x590] sm:$0xff]
    %v242 = vld [vmem:[#allocation2 + $0x598] sm:$0xff]
    %v243 = vld [vmem:[#allocation2 + $0x5a0] sm:$0xff]
    %v244 = vld [vmem:[#allocation2 + $0x5a8] sm:$0xff]
    %v245 = vld [vmem:[#allocation2 + $0x5b0] sm:$0xff]
    %v246 = vld [vmem:[#allocation2 + $0x5b8] sm:$0xff]
    %v247 = vld [vmem:[#allocation2 + $0x5c0] sm:$0xff]
    %v248 = vld [vmem:[#allocation2 + $0x5c8] sm:$0xff]
    %v249 = vld [vmem:[#allocation2 + $0x5d0] sm:$0xff]
    %v250 = vld [vmem:[#allocation2 + $0x5d8] sm:$0xff]
    %v251 = vld [vmem:[#allocation2 + $0x5e0] sm:$0xff]
    %v252 = vld [vmem:[#allocation2 + $0x5e8] sm:$0xff]
    %v253 = vld [vmem:[#allocation2 + $0x5f0] sm:$0xff]
    %v254 = vld [vmem:[#allocation2 + $0x5f8] sm:$0xff]
    %v255 = vld [vmem:[#allocation2 + $0x600] sm:$0xff]
    %v256 = vld [vmem:[#allocation2 + $0x608] sm:$0xff]
    %v257 = vld [vmem:[#allocation2 + $0x610] sm:$0xff]
    %v258 = vld [vmem:[#allocation2 + $0x618] sm:$0xff]
    %v259 = vld [vmem:[%s2] sm:$0xf]
    %v261 = vlaneseq
    %v262 = vshrl.u32 %v261, 7
    %v263 = vsub.s32 0, %v262
    %v264 = vrot.slane %v259, %v263
    %v265 = vlaneseq
    %v266 = vshrl.u32 %v265, 7
    %v267 = vsub.s32 1, %v266
    %v268 = vrot.slane %v259, %v267
    %v269 = vlaneseq
    %v270 = vshrl.u32 %v269, 7
    %v271 = vsub.s32 2, %v270
    %v272 = vrot.slane %v259, %v271
    %v273 = vlaneseq
    %v274 = vshrl.u32 %v273, 7
    %v275 = vsub.s32 3, %v274
    %v276 = vrot.slane %v259, %v275
    %v289 = vunpack.c.l.b16 %v55
    %v290 = vunpack.c.h.b16 %v55
    %v291 = vunpack.c.l.b16 %v56
    %v292 = vunpack.c.h.b16 %v56
    %v293 = vunpack.c.l.b16 %v57
    %v294 = vunpack.c.h.b16 %v57
    %v295 = vunpack.c.l.b16 %v58
    %v296 = vunpack.c.l.b16 %v59
    %v297 = vunpack.c.h.b16 %v59
    %v298 = vunpack.c.l.b16 %v60
    %v299 = vunpack.c.h.b16 %v60
    %v300 = vunpack.c.l.b16 %v61
    %v301 = vunpack.c.h.b16 %v61
    %v302 = vunpack.c.l.b16 %v62
    %v303 = vpack.c.b16 %v296, %v289
    %v304 = vpack.c.b16 %v297, %v290
    %v305 = vpack.c.b16 %v298, %v291
    %v306 = vpack.c.b16 %v299, %v292
    %v307 = vpack.c.b16 %v300, %v293
    %v308 = vpack.c.b16 %v301, %v294
    %v309 = vpack.c.b16 %v302, %v295
    %v512 = vunpack.c.l.b16 %v63
    %v513 = vunpack.c.h.b16 %v63
    %v514 = vunpack.c.l.b16 %v64
    %v515 = vunpack.c.h.b16 %v64
    %v516 = vunpack.c.l.b16 %v65
    %v517 = vunpack.c.h.b16 %v65
    %v518 = vunpack.c.l.b16 %v66
    %v519 = vunpack.c.h.b16 %v66
    %v520 = vunpack.c.l.b16 %v67
    %v521 = vunpack.c.h.b16 %v67
    %v522 = vunpack.c.l.b16 %v68
    %v523 = vunpack.c.h.b16 %v68
    %v524 = vunpack.c.l.b16 %v69
    %v525 = vunpack.c.h.b16 %v69
    %v526 = vunpack.c.l.b16 %v70
    %v527 = vunpack.c.h.b16 %v70
    %v528 = vunpack.c.l.b16 %v71
    %v529 = vunpack.c.h.b16 %v71
    %v530 = vunpack.c.l.b16 %v72
    %v531 = vunpack.c.h.b16 %v72
    %v532 = vunpack.c.l.b16 %v73
    %v533 = vunpack.c.h.b16 %v73
    %v534 = vunpack.c.l.b16 %v74
    %v535 = vunpack.c.h.b16 %v74
    %v536 = vunpack.c.l.b16 %v75
    %v537 = vunpack.c.h.b16 %v75
    %v538 = vunpack.c.l.b16 %v76
    %v539 = vunpack.c.h.b16 %v76
    %v540 = vunpack.c.l.b16 %v77
    %v541 = vunpack.c.h.b16 %v77
    %v542 = vunpack.c.l.b16 %v78
    %v543 = vunpack.c.h.b16 %v78
    %v544 = vunpack.c.l.b16 %v79
    %v545 = vunpack.c.h.b16 %v79
    %v546 = vunpack.c.l.b16 %v80
    %v547 = vunpack.c.h.b16 %v80
    %v548 = vunpack.c.l.b16 %v81
    %v549 = vunpack.c.h.b16 %v81
    %v550 = vunpack.c.l.b16 %v82
    %v551 = vunpack.c.h.b16 %v82
    %v552 = vunpack.c.l.b16 %v83
    %v553 = vunpack.c.h.b16 %v83
    %v554 = vunpack.c.l.b16 %v84
    %v555 = vunpack.c.h.b16 %v84
    %v556 = vunpack.c.l.b16 %v85
    %v557 = vunpack.c.h.b16 %v85
    %v558 = vunpack.c.l.b16 %v86
    %v559 = vunpack.c.h.b16 %v86
    %v560 = vunpack.c.l.b16 %v87
    %v561 = vunpack.c.h.b16 %v87
    %v562 = vunpack.c.l.b16 %v88
    %v563 = vunpack.c.h.b16 %v88
    %v564 = vunpack.c.l.b16 %v89
    %v565 = vunpack.c.h.b16 %v89
    %v566 = vunpack.c.l.b16 %v90
    %v567 = vunpack.c.h.b16 %v90
    %v568 = vunpack.c.l.b16 %v91
    %v569 = vunpack.c.h.b16 %v91
    %v570 = vunpack.c.l.b16 %v92
    %v571 = vunpack.c.h.b16 %v92
    %v572 = vunpack.c.l.b16 %v93
    %v573 = vunpack.c.h.b16 %v93
    %v574 = vunpack.c.l.b16 %v94
    %v575 = vunpack.c.h.b16 %v94
    %v576 = vunpack.c.l.b16 %v95
    %v577 = vunpack.c.h.b16 %v95
    %v578 = vunpack.c.l.b16 %v96
    %v579 = vunpack.c.h.b16 %v96
    %v580 = vunpack.c.l.b16 %v97
    %v581 = vunpack.c.h.b16 %v97
    %v582 = vunpack.c.l.b16 %v98
    %v583 = vunpack.c.h.b16 %v98
    %v584 = vunpack.c.l.b16 %v99
    %v585 = vunpack.c.h.b16 %v99
    %v586 = vunpack.c.l.b16 %v100
    %v587 = vunpack.c.h.b16 %v100
    %v588 = vunpack.c.l.b16 %v101
    %v589 = vunpack.c.h.b16 %v101
    %v590 = vunpack.c.l.b16 %v102
    %v591 = vunpack.c.h.b16 %v102
    %v592 = vunpack.c.l.b16 %v103
    %v593 = vunpack.c.h.b16 %v103
    %v594 = vunpack.c.l.b16 %v104
    %v595 = vunpack.c.h.b16 %v104
    %v596 = vunpack.c.l.b16 %v105
    %v597 = vunpack.c.h.b16 %v105
    %v598 = vunpack.c.l.b16 %v106
    %v599 = vunpack.c.h.b16 %v106
    %v600 = vunpack.c.l.b16 %v107
    %v601 = vunpack.c.h.b16 %v107
    %v602 = vunpack.c.l.b16 %v108
    %v603 = vunpack.c.h.b16 %v108
    %v604 = vunpack.c.l.b16 %v109
    %v605 = vunpack.c.h.b16 %v109
    %v606 = vunpack.c.l.b16 %v110
    %v607 = vunpack.c.h.b16 %v110
    %v608 = vunpack.c.l.b16 %v111
    %v609 = vunpack.c.h.b16 %v111
    %v610 = vunpack.c.l.b16 %v112
    %v611 = vunpack.c.h.b16 %v112
    %v612 = vunpack.c.l.b16 %v113
    %v613 = vunpack.c.h.b16 %v113
    %v614 = vunpack.c.l.b16 %v114
    %v615 = vunpack.c.h.b16 %v114
    %v616 = vunpack.c.l.b16 %v115
    %v617 = vunpack.c.h.b16 %v115
    %v618 = vunpack.c.l.b16 %v116
    %v619 = vunpack.c.h.b16 %v116
    %v620 = vunpack.c.l.b16 %v117
    %v621 = vunpack.c.h.b16 %v117
    %v622 = vunpack.c.l.b16 %v118
    %v623 = vunpack.c.h.b16 %v118
    %v624 = vunpack.c.l.b16 %v119
    %v625 = vunpack.c.h.b16 %v119
    %v626 = vunpack.c.l.b16 %v120
    %v627 = vunpack.c.h.b16 %v120
    %v628 = vunpack.c.l.b16 %v121
    %v629 = vunpack.c.h.b16 %v121
    %v630 = vunpack.c.l.b16 %v122
    %v631 = vunpack.c.h.b16 %v122
    %v632 = vunpack.c.l.b16 %v123
    %v633 = vunpack.c.h.b16 %v123
    %v634 = vunpack.c.l.b16 %v124
    %v635 = vunpack.c.h.b16 %v124
    %v636 = vunpack.c.l.b16 %v125
    %v637 = vunpack.c.h.b16 %v125
    %v638 = vunpack.c.l.b16 %v126
    %v639 = vunpack.c.h.b16 %v126
    %v640 = vunpack.c.l.b16 %v127
    %v641 = vunpack.c.h.b16 %v127
    %v642 = vunpack.c.l.b16 %v128
    %v643 = vunpack.c.h.b16 %v128
    %v644 = vunpack.c.l.b16 %v129
    %v645 = vunpack.c.h.b16 %v129
    %v646 = vunpack.c.l.b16 %v130
    %v647 = vunpack.c.h.b16 %v130
    %v648 = vunpack.c.l.b16 %v131
    %v649 = vunpack.c.h.b16 %v131
    %v650 = vunpack.c.l.b16 %v132
    %v651 = vunpack.c.h.b16 %v132
    %v652 = vunpack.c.l.b16 %v133
    %v653 = vunpack.c.h.b16 %v133
    %v654 = vunpack.c.l.b16 %v134
    %v655 = vunpack.c.h.b16 %v134
    %v656 = vunpack.c.l.b16 %v135
    %v657 = vunpack.c.h.b16 %v135
    %v658 = vunpack.c.l.b16 %v136
    %v659 = vunpack.c.h.b16 %v136
    %v660 = vunpack.c.l.b16 %v137
    %v661 = vunpack.c.h.b16 %v137
    %v662 = vunpack.c.l.b16 %v138
    %v663 = vunpack.c.h.b16 %v138
    %v664 = vunpack.c.l.b16 %v139
    %v665 = vunpack.c.h.b16 %v139
    %v666 = vunpack.c.l.b16 %v140
    %v667 = vunpack.c.h.b16 %v140
    %v668 = vunpack.c.l.b16 %v141
    %v669 = vunpack.c.h.b16 %v141
    %v670 = vunpack.c.l.b16 %v142
    %v671 = vunpack.c.h.b16 %v142
    %v672 = vunpack.c.l.b16 %v143
    %v673 = vunpack.c.h.b16 %v143
    %v674 = vunpack.c.l.b16 %v144
    %v675 = vunpack.c.h.b16 %v144
    %v676 = vunpack.c.l.b16 %v145
    %v677 = vunpack.c.h.b16 %v145
    %v678 = vunpack.c.l.b16 %v146
    %v679 = vunpack.c.h.b16 %v146
    %v680 = vunpack.c.l.b16 %v147
    %v681 = vunpack.c.h.b16 %v147
    %v682 = vunpack.c.l.b16 %v148
    %v683 = vunpack.c.h.b16 %v148
    %v684 = vunpack.c.l.b16 %v149
    %v685 = vunpack.c.h.b16 %v149
    %v686 = vunpack.c.l.b16 %v150
    %v687 = vunpack.c.h.b16 %v150
    %v688 = vunpack.c.l.b16 %v151
    %v689 = vunpack.c.h.b16 %v151
    %v690 = vunpack.c.l.b16 %v152
    %v691 = vunpack.c.h.b16 %v152
    %v692 = vunpack.c.l.b16 %v153
    %v693 = vunpack.c.h.b16 %v153
    %v694 = vunpack.c.l.b16 %v154
    %v695 = vunpack.c.h.b16 %v154
    %v696 = vunpack.c.l.b16 %v155
    %v697 = vunpack.c.h.b16 %v155
    %v698 = vunpack.c.l.b16 %v156
    %v699 = vunpack.c.h.b16 %v156
    %v700 = vunpack.c.l.b16 %v157
    %v701 = vunpack.c.h.b16 %v157
    %v702 = vunpack.c.l.b16 %v158
    %v703 = vunpack.c.h.b16 %v158
    %v704 = vunpack.c.l.b16 %v159
    %v705 = vunpack.c.h.b16 %v159
    %v706 = vunpack.c.l.b16 %v160
    %v707 = vunpack.c.h.b16 %v160
    %v708 = vunpack.c.l.b16 %v161
    %v709 = vunpack.c.h.b16 %v161
    %v710 = vunpack.c.l.b16 %v162
    %v711 = vunpack.c.h.b16 %v162
    %v712 = vunpack.c.l.b16 %v163
    %v713 = vunpack.c.h.b16 %v163
    %v714 = vunpack.c.l.b16 %v164
    %v715 = vunpack.c.h.b16 %v164
    %v716 = vunpack.c.l.b16 %v165
    %v717 = vunpack.c.h.b16 %v165
    %v718 = vunpack.c.l.b16 %v166
    %v719 = vunpack.c.h.b16 %v166
    %v720 = vunpack.c.l.b16 %v167
    %v721 = vunpack.c.h.b16 %v167
    %v722 = vunpack.c.l.b16 %v168
    %v723 = vunpack.c.h.b16 %v168
    %v724 = vunpack.c.l.b16 %v169
    %v725 = vunpack.c.h.b16 %v169
    %v726 = vunpack.c.l.b16 %v170
    %v727 = vunpack.c.h.b16 %v170
    %v728 = vunpack.c.l.b16 %v171
    %v729 = vunpack.c.h.b16 %v171
    %v730 = vunpack.c.l.b16 %v172
    %v731 = vunpack.c.h.b16 %v172
    %v732 = vunpack.c.l.b16 %v173
    %v733 = vunpack.c.h.b16 %v173
    %v734 = vunpack.c.l.b16 %v174
    %v735 = vunpack.c.h.b16 %v174
    %v736 = vunpack.c.l.b16 %v175
    %v737 = vunpack.c.h.b16 %v175
    %v738 = vunpack.c.l.b16 %v176
    %v739 = vunpack.c.h.b16 %v176
    %v740 = vunpack.c.l.b16 %v177
    %v741 = vunpack.c.h.b16 %v177
    %v742 = vunpack.c.l.b16 %v178
    %v743 = vunpack.c.h.b16 %v178
    %v744 = vunpack.c.l.b16 %v179
    %v745 = vunpack.c.h.b16 %v179
    %v746 = vunpack.c.l.b16 %v180
    %v747 = vunpack.c.h.b16 %v180
    %v748 = vunpack.c.l.b16 %v181
    %v749 = vunpack.c.h.b16 %v181
    %v750 = vunpack.c.l.b16 %v182
    %v751 = vunpack.c.h.b16 %v182
    %v752 = vunpack.c.l.b16 %v183
    %v753 = vunpack.c.h.b16 %v183
    %v754 = vunpack.c.l.b16 %v184
    %v755 = vunpack.c.h.b16 %v184
    %v756 = vunpack.c.l.b16 %v185
    %v757 = vunpack.c.h.b16 %v185
    %v758 = vunpack.c.l.b16 %v186
    %v759 = vunpack.c.h.b16 %v186
    %v760 = vunpack.c.l.b16 %v187
    %v761 = vunpack.c.h.b16 %v187
    %v762 = vunpack.c.l.b16 %v188
    %v763 = vunpack.c.h.b16 %v188
    %v764 = vunpack.c.l.b16 %v189
    %v765 = vunpack.c.h.b16 %v189
    %v766 = vunpack.c.l.b16 %v190
    %v767 = vunpack.c.h.b16 %v190
    %v768 = vunpack.c.l.b16 %v191
    %v769 = vunpack.c.h.b16 %v191
    %v770 = vunpack.c.l.b16 %v192
    %v771 = vunpack.c.h.b16 %v192
    %v772 = vunpack.c.l.b16 %v193
    %v773 = vunpack.c.h.b16 %v193
    %v774 = vunpack.c.l.b16 %v194
    %v775 = vunpack.c.h.b16 %v194
    %v776 = vunpack.c.l.b16 %v195
    %v777 = vunpack.c.h.b16 %v195
    %v778 = vunpack.c.l.b16 %v196
    %v779 = vunpack.c.h.b16 %v196
    %v780 = vunpack.c.l.b16 %v197
    %v781 = vunpack.c.h.b16 %v197
    %v782 = vunpack.c.l.b16 %v198
    %v783 = vunpack.c.h.b16 %v198
    %v784 = vunpack.c.l.b16 %v199
    %v785 = vunpack.c.h.b16 %v199
    %v786 = vunpack.c.l.b16 %v200
    %v787 = vunpack.c.h.b16 %v200
    %v788 = vunpack.c.l.b16 %v201
    %v789 = vunpack.c.h.b16 %v201
    %v790 = vunpack.c.l.b16 %v202
    %v791 = vunpack.c.h.b16 %v202
    %v792 = vunpack.c.l.b16 %v203
    %v793 = vunpack.c.h.b16 %v203
    %v794 = vunpack.c.l.b16 %v204
    %v795 = vunpack.c.h.b16 %v204
    %v796 = vunpack.c.l.b16 %v205
    %v797 = vunpack.c.h.b16 %v205
    %v798 = vunpack.c.l.b16 %v206
    %v799 = vunpack.c.h.b16 %v206
    %v800 = vunpack.c.l.b16 %v207
    %v801 = vunpack.c.h.b16 %v207
    %v802 = vunpack.c.l.b16 %v208
    %v803 = vunpack.c.h.b16 %v208
    %v804 = vunpack.c.l.b16 %v209
    %v805 = vunpack.c.h.b16 %v209
    %v806 = vunpack.c.l.b16 %v210
    %v807 = vunpack.c.h.b16 %v210
    %v808 = vunpack.c.l.b16 %v211
    %v809 = vunpack.c.h.b16 %v211
    %v810 = vunpack.c.l.b16 %v212
    %v811 = vunpack.c.h.b16 %v212
    %v812 = vunpack.c.l.b16 %v213
    %v813 = vunpack.c.h.b16 %v213
    %v814 = vunpack.c.l.b16 %v214
    %v815 = vunpack.c.h.b16 %v214
    %v816 = vunpack.c.l.b16 %v215
    %v817 = vunpack.c.h.b16 %v215
    %v818 = vunpack.c.l.b16 %v216
    %v819 = vunpack.c.h.b16 %v216
    %v820 = vunpack.c.l.b16 %v217
    %v821 = vunpack.c.h.b16 %v217
    %v822 = vunpack.c.l.b16 %v218
    %v823 = vunpack.c.h.b16 %v218
    %v824 = vunpack.c.l.b16 %v219
    %v825 = vunpack.c.h.b16 %v219
    %v826 = vunpack.c.l.b16 %v220
    %v827 = vunpack.c.h.b16 %v220
    %v828 = vunpack.c.l.b16 %v221
    %v829 = vunpack.c.h.b16 %v221
    %v830 = vunpack.c.l.b16 %v222
    %v831 = vunpack.c.h.b16 %v222
    %v832 = vunpack.c.l.b16 %v223
    %v833 = vunpack.c.h.b16 %v223
    %v834 = vunpack.c.l.b16 %v224
    %v835 = vunpack.c.h.b16 %v224
    %v836 = vunpack.c.l.b16 %v225
    %v837 = vunpack.c.h.b16 %v225
    %v838 = vunpack.c.l.b16 %v226
    %v839 = vunpack.c.h.b16 %v226
    %v840 = vunpack.c.l.b16 %v227
    %v841 = vunpack.c.h.b16 %v227
    %v842 = vunpack.c.l.b16 %v228
    %v843 = vunpack.c.h.b16 %v228
    %v844 = vunpack.c.l.b16 %v229
    %v845 = vunpack.c.h.b16 %v229
    %v846 = vunpack.c.l.b16 %v230
    %v847 = vunpack.c.h.b16 %v230
    %v848 = vunpack.c.l.b16 %v231
    %v849 = vunpack.c.h.b16 %v231
    %v850 = vunpack.c.l.b16 %v232
    %v851 = vunpack.c.h.b16 %v232
    %v852 = vunpack.c.l.b16 %v233
    %v853 = vunpack.c.h.b16 %v233
    %v854 = vunpack.c.l.b16 %v234
    %v855 = vunpack.c.h.b16 %v234
    %v856 = vunpack.c.l.b16 %v235
    %v857 = vunpack.c.h.b16 %v235
    %v858 = vunpack.c.l.b16 %v236
    %v859 = vunpack.c.h.b16 %v236
    %v860 = vunpack.c.l.b16 %v237
    %v861 = vunpack.c.h.b16 %v237
    %v862 = vunpack.c.l.b16 %v238
    %v863 = vunpack.c.h.b16 %v238
    %v864 = vunpack.c.l.b16 %v239
    %v865 = vunpack.c.h.b16 %v239
    %v866 = vunpack.c.l.b16 %v240
    %v867 = vunpack.c.h.b16 %v240
    %v868 = vunpack.c.l.b16 %v241
    %v869 = vunpack.c.h.b16 %v241
    %v870 = vunpack.c.l.b16 %v242
    %v871 = vunpack.c.h.b16 %v242
    %v872 = vunpack.c.l.b16 %v243
    %v873 = vunpack.c.h.b16 %v243
    %v874 = vunpack.c.l.b16 %v244
    %v875 = vunpack.c.h.b16 %v244
    %v876 = vunpack.c.l.b16 %v245
    %v877 = vunpack.c.h.b16 %v245
    %v878 = vunpack.c.l.b16 %v246
    %v879 = vunpack.c.h.b16 %v246
    %v880 = vunpack.c.l.b16 %v247
    %v881 = vunpack.c.h.b16 %v247
    %v882 = vunpack.c.l.b16 %v248
    %v883 = vunpack.c.h.b16 %v248
    %v884 = vunpack.c.l.b16 %v249
    %v885 = vunpack.c.h.b16 %v249
    %v886 = vunpack.c.l.b16 %v250
    %v887 = vunpack.c.h.b16 %v250
    %v888 = vunpack.c.l.b16 %v251
    %v889 = vunpack.c.h.b16 %v251
    %v890 = vunpack.c.l.b16 %v252
    %v891 = vunpack.c.h.b16 %v252
    %v892 = vunpack.c.l.b16 %v253
    %v893 = vunpack.c.h.b16 %v253
    %v894 = vunpack.c.l.b16 %v254
    %v895 = vunpack.c.h.b16 %v254
    %v896 = vunpack.c.l.b16 %v255
    %v897 = vunpack.c.h.b16 %v255
    %v898 = vunpack.c.l.b16 %v256
    %v899 = vunpack.c.h.b16 %v256
    %v900 = vunpack.c.l.b16 %v257
    %v901 = vunpack.c.h.b16 %v257
    %v902 = vunpack.c.l.b16 %v258
    %v903 = vunpack.c.h.b16 %v258
    %v904 = vpack.c.b16 %v516, %v512
    %v905 = vpack.c.b16 %v517, %v513
    %v906 = vpack.c.b16 %v518, %v514
    %v907 = vpack.c.b16 %v519, %v515
    %v908 = vpack.c.b16 %v524, %v520
    %v909 = vpack.c.b16 %v525, %v521
    %v910 = vpack.c.b16 %v526, %v522
    %v911 = vpack.c.b16 %v527, %v523
    %v912 = vpack.c.b16 %v532, %v528
    %v913 = vpack.c.b16 %v533, %v529
    %v914 = vpack.c.b16 %v534, %v530
    %v915 = vpack.c.b16 %v535, %v531
    %v916 = vpack.c.b16 %v540, %v536
    %v917 = vpack.c.b16 %v541, %v537
    %v918 = vpack.c.b16 %v542, %v538
    %v919 = vpack.c.b16 %v543, %v539
    %v920 = vpack.c.b16 %v548, %v544
    %v921 = vpack.c.b16 %v549, %v545
    %v922 = vpack.c.b16 %v550, %v546
    %v923 = vpack.c.b16 %v551, %v547
    %v924 = vpack.c.b16 %v556, %v552
    %v925 = vpack.c.b16 %v557, %v553
    %v926 = vpack.c.b16 %v558, %v554
    %v927 = vpack.c.b16 %v559, %v555
    %v928 = vpack.c.b16 %v564, %v560
    %v929 = vpack.c.b16 %v565, %v561
    %v930 = vpack.c.b16 %v566, %v562
    %v931 = vpack.c.b16 %v567, %v563
    %v932 = vpack.c.b16 %v572, %v568
    %v933 = vpack.c.b16 %v573, %v569
    %v934 = vpack.c.b16 %v574, %v570
    %v935 = vpack.c.b16 %v575, %v571
    %v936 = vpack.c.b16 %v580, %v576
    %v937 = vpack.c.b16 %v581, %v577
    %v938 = vpack.c.b16 %v582, %v578
    %v939 = vpack.c.b16 %v583, %v579
    %v940 = vpack.c.b16 %v588, %v584
    %v941 = vpack.c.b16 %v589, %v585
    %v942 = vpack.c.b16 %v590, %v586
    %v943 = vpack.c.b16 %v591, %v587
    %v944 = vpack.c.b16 %v596, %v592
    %v945 = vpack.c.b16 %v597, %v593
    %v946 = vpack.c.b16 %v598, %v594
    %v947 = vpack.c.b16 %v599, %v595
    %v948 = vpack.c.b16 %v604, %v600
    %v949 = vpack.c.b16 %v605, %v601
    %v950 = vpack.c.b16 %v606, %v602
    %v951 = vpack.c.b16 %v607, %v603
    %v952 = vpack.c.b16 %v612, %v608
    %v953 = vpack.c.b16 %v613, %v609
    %v954 = vpack.c.b16 %v614, %v610
    %v955 = vpack.c.b16 %v615, %v611
    %v956 = vpack.c.b16 %v620, %v616
    %v957 = vpack.c.b16 %v621, %v617
    %v958 = vpack.c.b16 %v622, %v618
    %v959 = vpack.c.b16 %v623, %v619
    %v960 = vpack.c.b16 %v628, %v624
    %v961 = vpack.c.b16 %v629, %v625
    %v962 = vpack.c.b16 %v630, %v626
    %v963 = vpack.c.b16 %v631, %v627
    %v964 = vpack.c.b16 %v636, %v632
    %v965 = vpack.c.b16 %v637, %v633
    %v966 = vpack.c.b16 %v638, %v634
    %v967 = vpack.c.b16 %v639, %v635
    %v968 = vpack.c.b16 %v644, %v640
    %v969 = vpack.c.b16 %v645, %v641
    %v970 = vpack.c.b16 %v646, %v642
    %v971 = vpack.c.b16 %v647, %v643
    %v972 = vpack.c.b16 %v652, %v648
    %v973 = vpack.c.b16 %v653, %v649
    %v974 = vpack.c.b16 %v654, %v650
    %v975 = vpack.c.b16 %v655, %v651
    %v976 = vpack.c.b16 %v660, %v656
    %v977 = vpack.c.b16 %v661, %v657
    %v978 = vpack.c.b16 %v662, %v658
    %v979 = vpack.c.b16 %v663, %v659
    %v980 = vpack.c.b16 %v668, %v664
    %v981 = vpack.c.b16 %v669, %v665
    %v982 = vpack.c.b16 %v670, %v666
    %v983 = vpack.c.b16 %v671, %v667
    %v984 = vpack.c.b16 %v676, %v672
    %v985 = vpack.c.b16 %v677, %v673
    %v986 = vpack.c.b16 %v678, %v674
    %v987 = vpack.c.b16 %v679, %v675
    %v988 = vpack.c.b16 %v684, %v680
    %v989 = vpack.c.b16 %v685, %v681
    %v990 = vpack.c.b16 %v686, %v682
    %v991 = vpack.c.b16 %v687, %v683
    %v992 = vpack.c.b16 %v692, %v688
    %v993 = vpack.c.b16 %v693, %v689
    %v994 = vpack.c.b16 %v694, %v690
    %v995 = vpack.c.b16 %v695, %v691
    %v996 = vpack.c.b16 %v700, %v696
    %v997 = vpack.c.b16 %v701, %v697
    %v998 = vpack.c.b16 %v702, %v698
    %v999 = vpack.c.b16 %v703, %v699
    %v1000 = vpack.c.b16 %v708, %v704
    %v1001 = vpack.c.b16 %v709, %v705
    %v1002 = vpack.c.b16 %v710, %v706
    %v1003 = vpack.c.b16 %v711, %v707
    %v1004 = vpack.c.b16 %v716, %v712
    %v1005 = vpack.c.b16 %v717, %v713
    %v1006 = vpack.c.b16 %v718, %v714
    %v1007 = vpack.c.b16 %v719, %v715
    %v1008 = vpack.c.b16 %v724, %v720
    %v1009 = vpack.c.b16 %v725, %v721
    %v1010 = vpack.c.b16 %v726, %v722
    %v1011 = vpack.c.b16 %v727, %v723
    %v1012 = vpack.c.b16 %v732, %v728
    %v1013 = vpack.c.b16 %v733, %v729
    %v1014 = vpack.c.b16 %v734, %v730
    %v1015 = vpack.c.b16 %v735, %v731
    %v1016 = vpack.c.b16 %v740, %v736
    %v1017 = vpack.c.b16 %v741, %v737
    %v1018 = vpack.c.b16 %v742, %v738
    %v1019 = vpack.c.b16 %v743, %v739
    %v1020 = vpack.c.b16 %v748, %v744
    %v1021 = vpack.c.b16 %v749, %v745
    %v1022 = vpack.c.b16 %v750, %v746
    %v1023 = vpack.c.b16 %v751, %v747
    %v1024 = vpack.c.b16 %v756, %v752
    %v1025 = vpack.c.b16 %v757, %v753
    %v1026 = vpack.c.b16 %v758, %v754
    %v1027 = vpack.c.b16 %v759, %v755
    %v1028 = vpack.c.b16 %v764, %v760
    %v1029 = vpack.c.b16 %v765, %v761
    %v1030 = vpack.c.b16 %v766, %v762
    %v1031 = vpack.c.b16 %v767, %v763
    %v1032 = vpack.c.b16 %v772, %v768
    %v1033 = vpack.c.b16 %v773, %v769
    %v1034 = vpack.c.b16 %v774, %v770
    %v1035 = vpack.c.b16 %v775, %v771
    %v1036 = vpack.c.b16 %v780, %v776
    %v1037 = vpack.c.b16 %v781, %v777
    %v1038 = vpack.c.b16 %v782, %v778
    %v1039 = vpack.c.b16 %v783, %v779
    %v1040 = vpack.c.b16 %v788, %v784
    %v1041 = vpack.c.b16 %v789, %v785
    %v1042 = vpack.c.b16 %v790, %v786
    %v1043 = vpack.c.b16 %v791, %v787
    %v1044 = vpack.c.b16 %v796, %v792
    %v1045 = vpack.c.b16 %v797, %v793
    %v1046 = vpack.c.b16 %v798, %v794
    %v1047 = vpack.c.b16 %v799, %v795
    %v1048 = vpack.c.b16 %v804, %v800
    %v1049 = vpack.c.b16 %v805, %v801
    %v1050 = vpack.c.b16 %v806, %v802
    %v1051 = vpack.c.b16 %v807, %v803
    %v1052 = vpack.c.b16 %v812, %v808
    %v1053 = vpack.c.b16 %v813, %v809
    %v1054 = vpack.c.b16 %v814, %v810
    %v1055 = vpack.c.b16 %v815, %v811
    %v1056 = vpack.c.b16 %v820, %v816
    %v1057 = vpack.c.b16 %v821, %v817
    %v1058 = vpack.c.b16 %v822, %v818
    %v1059 = vpack.c.b16 %v823, %v819
    %v1060 = vpack.c.b16 %v828, %v824
    %v1061 = vpack.c.b16 %v829, %v825
    %v1062 = vpack.c.b16 %v830, %v826
    %v1063 = vpack.c.b16 %v831, %v827
    %v1064 = vpack.c.b16 %v836, %v832
    %v1065 = vpack.c.b16 %v837, %v833
    %v1066 = vpack.c.b16 %v838, %v834
    %v1067 = vpack.c.b16 %v839, %v835
    %v1068 = vpack.c.b16 %v844, %v840
    %v1069 = vpack.c.b16 %v845, %v841
    %v1070 = vpack.c.b16 %v846, %v842
    %v1071 = vpack.c.b16 %v847, %v843
    %v1072 = vpack.c.b16 %v852, %v848
    %v1073 = vpack.c.b16 %v853, %v849
    %v1074 = vpack.c.b16 %v854, %v850
    %v1075 = vpack.c.b16 %v855, %v851
    %v1076 = vpack.c.b16 %v860, %v856
    %v1077 = vpack.c.b16 %v861, %v857
    %v1078 = vpack.c.b16 %v862, %v858
    %v1079 = vpack.c.b16 %v863, %v859
    %v1080 = vpack.c.b16 %v868, %v864
    %v1081 = vpack.c.b16 %v869, %v865
    %v1082 = vpack.c.b16 %v870, %v866
    %v1083 = vpack.c.b16 %v871, %v867
    %v1084 = vpack.c.b16 %v876, %v872
    %v1085 = vpack.c.b16 %v877, %v873
    %v1086 = vpack.c.b16 %v878, %v874
    %v1087 = vpack.c.b16 %v879, %v875
    %v1088 = vpack.c.b16 %v884, %v880
    %v1089 = vpack.c.b16 %v885, %v881
    %v1090 = vpack.c.b16 %v886, %v882
    %v1091 = vpack.c.b16 %v887, %v883
    %v1092 = vpack.c.b16 %v892, %v888
    %v1093 = vpack.c.b16 %v893, %v889
    %v1094 = vpack.c.b16 %v894, %v890
    %v1095 = vpack.c.b16 %v895, %v891
    %v1096 = vpack.c.b16 %v900, %v896
    %v1097 = vpack.c.b16 %v901, %v897
    %v1098 = vpack.c.b16 %v902, %v898
    %v1099 = vpack.c.b16 %v903, %v899
    %vm1296 = vcmask 130048
    %v1298 = vsel %vm1296, %v309, 0
    %1300 = vmatprep.subr.bf16.mxu0 %v905
    %1301 = vmatpush1.bf16.msra.mxu0 %v904
    %1302 = vmatprep.subr.bf16.mxu0 %v909
    %1303 = vmatpush1.bf16.msra.mxu0 %v908
    %1304 = vmatprep.subr.bf16.mxu0 %v913
    %1305 = vmatpush1.bf16.msra.mxu0 %v912
    %1306 = vmatprep.subr.bf16.mxu0 %v917
    %1307 = vmatpush1.bf16.msra.mxu0 %v916
    %1308 = vmatprep.subr.bf16.mxu0 %v921
    %1309 = vmatpush1.bf16.msra.mxu0 %v920
    %1310 = vmatprep.subr.bf16.mxu0 %v925
    %1311 = vmatpush1.bf16.msra.mxu0 %v924
    %1312 = vmatprep.subr.bf16.mxu0 %v929
    %1313 = vmatpush1.bf16.msra.mxu0 %v928
    %1314 = vmatprep.subr.bf16.mxu0 %v933
    %1315 = vmatpush1.bf16.msra.mxu0 %v932
    %1316 = vmatprep.subr.bf16.mxu0 %v937
    %1317 = vmatpush1.bf16.msra.mxu0 %v936
    %1318 = vmatprep.subr.bf16.mxu0 %v941
    %1319 = vmatpush1.bf16.msra.mxu0 %v940
    %1320 = vmatprep.subr.bf16.mxu0 %v945
    %1321 = vmatpush1.bf16.msra.mxu0 %v944
    %1322 = vmatprep.subr.bf16.mxu0 %v949
    %1323 = vmatpush1.bf16.msra.mxu0 %v948
    %1324 = vmatprep.subr.bf16.mxu0 %v953
    %1325 = vmatpush1.bf16.msra.mxu0 %v952
    %1326 = vmatprep.subr.bf16.mxu0 %v957
    %1327 = vmatpush1.bf16.msra.mxu0 %v956
    %1328 = vmatprep.subr.bf16.mxu0 %v961
    %1329 = vmatpush1.bf16.msra.mxu0 %v960
    %1330 = vmatprep.subr.bf16.mxu0 %v965
    %1331 = vmatpush1.bf16.msra.mxu0 %v964
    %1332 = vmatprep.mubr.bf16.mxu0 %v304
    %1333 = vmatmul.mubr.bf16.gmra.mrb[0].mxu0 %v303
    %v1334 = vpop.f32.mrb[0].mxu0
    %v1335 = vadd.f32 %v264, %v1334
    %v1336 = vpop.f32.mrb[0].mxu0
    %v1337 = vadd.f32 %v268, %v1336
    %v1338 = vpop.f32.mrb[0].mxu0
    %v1339 = vadd.f32 %v264, %v1338
    %v1340 = vpop.f32.mrb[0].mxu0
    %v1341 = vadd.f32 %v268, %v1340
    %1342 = vdwg.mxu0
    %1343 = vmatprep.subr.bf16.mxu0 %v969
    %1344 = vmatpush1.bf16.msra.mxu0 %v968
    %1345 = vmatprep.subr.bf16.mxu0 %v973
    %1346 = vmatpush1.bf16.msra.mxu0 %v972
    %1347 = vmatprep.subr.bf16.mxu0 %v977
    %1348 = vmatpush1.bf16.msra.mxu0 %v976
    %1349 = vmatprep.subr.bf16.mxu0 %v981
    %1350 = vmatpush1.bf16.msra.mxu0 %v980
    %1351 = vmatprep.subr.bf16.mxu0 %v985
    %1352 = vmatpush1.bf16.msra.mxu0 %v984
    %1353 = vmatprep.subr.bf16.mxu0 %v989
    %1354 = vmatpush1.bf16.msra.mxu0 %v988
    %1355 = vmatprep.subr.bf16.mxu0 %v993
    %1356 = vmatpush1.bf16.msra.mxu0 %v992
    %1357 = vmatprep.subr.bf16.mxu0 %v997
    %1358 = vmatpush1.bf16.msra.mxu0 %v996
    %1359 = vmatprep.subr.bf16.mxu0 %v1001
    %1360 = vmatpush1.bf16.msra.mxu0 %v1000
    %1361 = vmatprep.subr.bf16.mxu0 %v1005
    %1362 = vmatpush1.bf16.msra.mxu0 %v1004
    %1363 = vmatprep.subr.bf16.mxu0 %v1009
    %1364 = vmatpush1.bf16.msra.mxu0 %v1008
    %1365 = vmatprep.subr.bf16.mxu0 %v1013
    %1366 = vmatpush1.bf16.msra.mxu0 %v1012
    %1367 = vmatprep.subr.bf16.mxu0 %v1017
    %1368 = vmatpush1.bf16.msra.mxu0 %v1016
    %1369 = vmatprep.subr.bf16.mxu0 %v1021
    %1370 = vmatpush1.bf16.msra.mxu0 %v1020
    %1371 = vmatprep.subr.bf16.mxu0 %v1025
    %1372 = vmatpush1.bf16.msra.mxu0 %v1024
    %1373 = vmatprep.subr.bf16.mxu0 %v1029
    %1374 = vmatpush1.bf16.msra.mxu0 %v1028
    %1375 = vmatprep.mubr.bf16.mxu0 %v306
    %1376 = vmatmul.mubr.bf16.gmra.mrb[0].mxu0 %v305
    %v1377 = vpop.f32.mrb[0].mxu0
    %v1378 = vadd.f32 %v1335, %v1377
    %v1379 = vpop.f32.mrb[0].mxu0
    %v1380 = vadd.f32 %v1337, %v1379
    %v1381 = vpop.f32.mrb[0].mxu0
    %v1382 = vadd.f32 %v1339, %v1381
    %v1383 = vpop.f32.mrb[0].mxu0
    %v1384 = vadd.f32 %v1341, %v1383
    %1385 = vdwg.mxu0
    %1386 = vmatprep.subr.bf16.mxu0 %v1033
    %1387 = vmatpush1.bf16.msra.mxu0 %v1032
    %1388 = vmatprep.subr.bf16.mxu0 %v1037
    %1389 = vmatpush1.bf16.msra.mxu0 %v1036
    %1390 = vmatprep.subr.bf16.mxu0 %v1041
    %1391 = vmatpush1.bf16.msra.mxu0 %v1040
    %1392 = vmatprep.subr.bf16.mxu0 %v1045
    %1393 = vmatpush1.bf16.msra.mxu0 %v1044
    %1394 = vmatprep.subr.bf16.mxu0 %v1049
    %1395 = vmatpush1.bf16.msra.mxu0 %v1048
    %1396 = vmatprep.subr.bf16.mxu0 %v1053
    %1397 = vmatpush1.bf16.msra.mxu0 %v1052
    %1398 = vmatprep.subr.bf16.mxu0 %v1057
    %1399 = vmatpush1.bf16.msra.mxu0 %v1056
    %1400 = vmatprep.subr.bf16.mxu0 %v1061
    %1401 = vmatpush1.bf16.msra.mxu0 %v1060
    %1402 = vmatprep.subr.bf16.mxu0 %v1065
    %1403 = vmatpush1.bf16.msra.mxu0 %v1064
    %1404 = vmatprep.subr.bf16.mxu0 %v1069
    %1405 = vmatpush1.bf16.msra.mxu0 %v1068
    %1406 = vmatprep.subr.bf16.mxu0 %v1073
    %1407 = vmatpush1.bf16.msra.mxu0 %v1072
    %1408 = vmatprep.subr.bf16.mxu0 %v1077
    %1409 = vmatpush1.bf16.msra.mxu0 %v1076
    %1410 = vmatprep.subr.bf16.mxu0 %v1081
    %1411 = vmatpush1.bf16.msra.mxu0 %v1080
    %1412 = vmatprep.subr.bf16.mxu0 %v1085
    %1413 = vmatpush1.bf16.msra.mxu0 %v1084
    %1414 = vmatprep.subr.bf16.mxu0 %v1089
    %1415 = vmatpush1.bf16.msra.mxu0 %v1088
    %1416 = vmatprep.subr.bf16.mxu0 %v1093
    %1417 = vmatpush1.bf16.msra.mxu0 %v1092
    %1418 = vmatprep.mubr.bf16.mxu0 %v308
    %1419 = vmatmul.mubr.bf16.gmra.mrb[0].mxu0 %v307
    %v1420 = vpop.f32.mrb[0].mxu0
    %v1421 = vadd.f32 %v1378, %v1420
    %v1422 = vpop.f32.mrb[0].mxu0
    %v1423 = vadd.f32 %v1380, %v1422
    %v1424 = vpop.f32.mrb[0].mxu0
    %v1425 = vadd.f32 %v1382, %v1424
    %v1426 = vpop.f32.mrb[0].mxu0
    %v1427 = vadd.f32 %v1384, %v1426
    %1428 = vdwg.mxu0
    %1429 = vmatprep.subr.bf16.mxu0 %v1097
    %1430 = vmatpush1.bf16.msra.mxu0 %v1096
    %1431 = vmatprep.subr.bf16.mxu0 0
    %1432 = vmatpush1.bf16.msra.mxu0 0
    %1433 = vmatprep.subr.bf16.mxu0 0
    %1434 = vmatpush1.bf16.msra.mxu0 0
    %1435 = vmatprep.subr.bf16.mxu0 0
    %1436 = vmatpush1.bf16.msra.mxu0 0
    %1437 = vmatprep.subr.bf16.mxu0 0
    %1438 = vmatpush1.bf16.msra.mxu0 0
    %1439 = vmatprep.subr.bf16.mxu0 0
    %1440 = vmatpush1.bf16.msra.mxu0 0
    %1441 = vmatprep.subr.bf16.mxu0 0
    %1442 = vmatpush1.bf16.msra.mxu0 0
    %1443 = vmatprep.subr.bf16.mxu0 0
    %1444 = vmatpush1.bf16.msra.mxu0 0
    %1445 = vmatprep.subr.bf16.mxu0 0
    %1446 = vmatpush1.bf16.msra.mxu0 0
    %1447 = vmatprep.subr.bf16.mxu0 0
    %1448 = vmatpush1.bf16.msra.mxu0 0
    %1449 = vmatprep.subr.bf16.mxu0 0
    %1450 = vmatpush1.bf16.msra.mxu0 0
    %1451 = vmatprep.subr.bf16.mxu0 0
    %1452 = vmatpush1.bf16.msra.mxu0 0
    %1453 = vmatprep.subr.bf16.mxu0 0
    %1454 = vmatpush1.bf16.msra.mxu0 0
    %1455 = vmatprep.subr.bf16.mxu0 0
    %1456 = vmatpush1.bf16.msra.mxu0 0
    %1457 = vmatprep.subr.bf16.mxu0 0
    %1458 = vmatpush1.bf16.msra.mxu0 0
    %1459 = vmatprep.subr.bf16.mxu0 0
    %1460 = vmatpush1.bf16.msra.mxu0 0
    %1461 = vmatprep.mubr.bf16.mxu0 0
    %1462 = vmatmul.mubr.bf16.gmra.mrb[0].mxu0 %v1298
    %v1463 = vpop.f32.mrb[0].mxu0
    %v1464 = vadd.f32 %v1421, %v1463
    %v1465 = vpop.f32.mrb[0].mxu0
    %v1466 = vadd.f32 %v1423, %v1465
    %v1467 = vpop.f32.mrb[0].mxu0
    %v1468 = vadd.f32 %v1425, %v1467
    %v1469 = vpop.f32.mrb[0].mxu0
    %v1470 = vadd.f32 %v1427, %v1469
    %1471 = vdwg.mxu0
    %1472 = vmatprep.subr.bf16.mxu0 %v907
    %1473 = vmatpush1.bf16.msra.mxu0 %v906
    %1474 = vmatprep.subr.bf16.mxu0 %v911
    %1475 = vmatpush1.bf16.msra.mxu0 %v910
    %1476 = vmatprep.subr.bf16.mxu0 %v915
    %1477 = vmatpush1.bf16.msra.mxu0 %v914
    %1478 = vmatprep.subr.bf16.mxu0 %v919
    %1479 = vmatpush1.bf16.msra.mxu0 %v918
    %1480 = vmatprep.subr.bf16.mxu0 %v923
    %1481 = vmatpush1.bf16.msra.mxu0 %v922
    %1482 = vmatprep.subr.bf16.mxu0 %v927
    %1483 = vmatpush1.bf16.msra.mxu0 %v926
    %1484 = vmatprep.subr.bf16.mxu0 %v931
    %1485 = vmatpush1.bf16.msra.mxu0 %v930
    %1486 = vmatprep.subr.bf16.mxu0 %v935
    %1487 = vmatpush1.bf16.msra.mxu0 %v934
    %1488 = vmatprep.subr.bf16.mxu0 %v939
    %1489 = vmatpush1.bf16.msra.mxu0 %v938
    %1490 = vmatprep.subr.bf16.mxu0 %v943
    %1491 = vmatpush1.bf16.msra.mxu0 %v942
    %1492 = vmatprep.subr.bf16.mxu0 %v947
    %1493 = vmatpush1.bf16.msra.mxu0 %v946
    %1494 = vmatprep.subr.bf16.mxu0 %v951
    %1495 = vmatpush1.bf16.msra.mxu0 %v950
    %1496 = vmatprep.subr.bf16.mxu0 %v955
    %1497 = vmatpush1.bf16.msra.mxu0 %v954
    %1498 = vmatprep.subr.bf16.mxu0 %v959
    %1499 = vmatpush1.bf16.msra.mxu0 %v958
    %1500 = vmatprep.subr.bf16.mxu0 %v963
    %1501 = vmatpush1.bf16.msra.mxu0 %v962
    %1502 = vmatprep.subr.bf16.mxu0 %v967
    %1503 = vmatpush1.bf16.msra.mxu0 %v966
    %1504 = vmatprep.mubr.bf16.mxu0 %v304
    %1505 = vmatmul.mubr.bf16.gmra.mrb[0].mxu0 %v303
    %v1506 = vpop.f32.mrb[0].mxu0
    %v1507 = vadd.f32 %v272, %v1506
    %v1508 = vpop.f32.mrb[0].mxu0
    %v1509 = vadd.f32 %v276, %v1508
    %v1510 = vpop.f32.mrb[0].mxu0
    %v1511 = vadd.f32 %v272, %v1510
    %v1512 = vpop.f32.mrb[0].mxu0
    %v1513 = vadd.f32 %v276, %v1512
    %1514 = vdwg.mxu0
    %1515 = vmatprep.subr.bf16.mxu0 %v971
    %1516 = vmatpush1.bf16.msra.mxu0 %v970
    %1517 = vmatprep.subr.bf16.mxu0 %v975
    %1518 = vmatpush1.bf16.msra.mxu0 %v974
    %1519 = vmatprep.subr.bf16.mxu0 %v979
    %1520 = vmatpush1.bf16.msra.mxu0 %v978
    %1521 = vmatprep.subr.bf16.mxu0 %v983
    %1522 = vmatpush1.bf16.msra.mxu0 %v982
    %1523 = vmatprep.subr.bf16.mxu0 %v987
    %1524 = vmatpush1.bf16.msra.mxu0 %v986
    %1525 = vmatprep.subr.bf16.mxu0 %v991
    %1526 = vmatpush1.bf16.msra.mxu0 %v990
    %1527 = vmatprep.subr.bf16.mxu0 %v995
    %1528 = vmatpush1.bf16.msra.mxu0 %v994
    %1529 = vmatprep.subr.bf16.mxu0 %v999
    %1530 = vmatpush1.bf16.msra.mxu0 %v998
    %1531 = vmatprep.subr.bf16.mxu0 %v1003
    %1532 = vmatpush1.bf16.msra.mxu0 %v1002
    %1533 = vmatprep.subr.bf16.mxu0 %v1007
    %1534 = vmatpush1.bf16.msra.mxu0 %v1006
    %1535 = vmatprep.subr.bf16.mxu0 %v1011
    %1536 = vmatpush1.bf16.msra.mxu0 %v1010
    %1537 = vmatprep.subr.bf16.mxu0 %v1015
    %1538 = vmatpush1.bf16.msra.mxu0 %v1014
    %1539 = vmatprep.subr.bf16.mxu0 %v1019
    %1540 = vmatpush1.bf16.msra.mxu0 %v1018
    %1541 = vmatprep.subr.bf16.mxu0 %v1023
    %1542 = vmatpush1.bf16.msra.mxu0 %v1022
    %1543 = vmatprep.subr.bf16.mxu0 %v1027
    %1544 = vmatpush1.bf16.msra.mxu0 %v1026
    %1545 = vmatprep.subr.bf16.mxu0 %v1031
    %1546 = vmatpush1.bf16.msra.mxu0 %v1030
    %1547 = vmatprep.mubr.bf16.mxu0 %v306
    %1548 = vmatmul.mubr.bf16.gmra.mrb[0].mxu0 %v305
    %v1549 = vpop.f32.mrb[0].mxu0
    %v1550 = vadd.f32 %v1507, %v1549
    %v1551 = vpop.f32.mrb[0].mxu0
    %v1552 = vadd.f32 %v1509, %v1551
    %v1553 = vpop.f32.mrb[0].mxu0
    %v1554 = vadd.f32 %v1511, %v1553
    %v1555 = vpop.f32.mrb[0].mxu0
    %v1556 = vadd.f32 %v1513, %v1555
    %1557 = vdwg.mxu0
    %1558 = vmatprep.subr.bf16.mxu0 %v1035
    %1559 = vmatpush1.bf16.msra.mxu0 %v1034
    %1560 = vmatprep.subr.bf16.mxu0 %v1039
    %1561 = vmatpush1.bf16.msra.mxu0 %v1038
    %1562 = vmatprep.subr.bf16.mxu0 %v1043
    %1563 = vmatpush1.bf16.msra.mxu0 %v1042
    %1564 = vmatprep.subr.bf16.mxu0 %v1047
    %1565 = vmatpush1.bf16.msra.mxu0 %v1046
    %1566 = vmatprep.subr.bf16.mxu0 %v1051
    %1567 = vmatpush1.bf16.msra.mxu0 %v1050
    %1568 = vmatprep.subr.bf16.mxu0 %v1055
    %1569 = vmatpush1.bf16.msra.mxu0 %v1054
    %1570 = vmatprep.subr.bf16.mxu0 %v1059
    %1571 = vmatpush1.bf16.msra.mxu0 %v1058
    %1572 = vmatprep.subr.bf16.mxu0 %v1063
    %1573 = vmatpush1.bf16.msra.mxu0 %v1062
    %1574 = vmatprep.subr.bf16.mxu0 %v1067
    %1575 = vmatpush1.bf16.msra.mxu0 %v1066
    %1576 = vmatprep.subr.bf16.mxu0 %v1071
    %1577 = vmatpush1.bf16.msra.mxu0 %v1070
    %1578 = vmatprep.subr.bf16.mxu0 %v1075
    %1579 = vmatpush1.bf16.msra.mxu0 %v1074
    %1580 = vmatprep.subr.bf16.mxu0 %v1079
    %1581 = vmatpush1.bf16.msra.mxu0 %v1078
    %1582 = vmatprep.subr.bf16.mxu0 %v1083
    %1583 = vmatpush1.bf16.msra.mxu0 %v1082
    %1584 = vmatprep.subr.bf16.mxu0 %v1087
    %1585 = vmatpush1.bf16.msra.mxu0 %v1086
    %1586 = vmatprep.subr.bf16.mxu0 %v1091
    %1587 = vmatpush1.bf16.msra.mxu0 %v1090
    %1588 = vmatprep.subr.bf16.mxu0 %v1095
    %1589 = vmatpush1.bf16.msra.mxu0 %v1094
    %1590 = vmatprep.mubr.bf16.mxu0 %v308
    %1591 = vmatmul.mubr.bf16.gmra.mrb[0].mxu0 %v307
    %v1592 = vpop.f32.mrb[0].mxu0
    %v1593 = vadd.f32 %v1550, %v1592
    %v1594 = vpop.f32.mrb[0].mxu0
    %v1595 = vadd.f32 %v1552, %v1594
    %v1596 = vpop.f32.mrb[0].mxu0
    %v1597 = vadd.f32 %v1554, %v1596
    %v1598 = vpop.f32.mrb[0].mxu0
    %v1599 = vadd.f32 %v1556, %v1598
    %1600 = vdwg.mxu0
    %1601 = vmatprep.subr.bf16.mxu0 %v1099
    %1602 = vmatpush1.bf16.msra.mxu0 %v1098
    %1603 = vmatprep.subr.bf16.mxu0 0
    %1604 = vmatpush1.bf16.msra.mxu0 0
    %1605 = vmatprep.subr.bf16.mxu0 0
    %1606 = vmatpush1.bf16.msra.mxu0 0
    %1607 = vmatprep.subr.bf16.mxu0 0
    %1608 = vmatpush1.bf16.msra.mxu0 0
    %1609 = vmatprep.subr.bf16.mxu0 0
    %1610 = vmatpush1.bf16.msra.mxu0 0
    %1611 = vmatprep.subr.bf16.mxu0 0
    %1612 = vmatpush1.bf16.msra.mxu0 0
    %1613 = vmatprep.subr.bf16.mxu0 0
    %1614 = vmatpush1.bf16.msra.mxu0 0
    %1615 = vmatprep.subr.bf16.mxu0 0
    %1616 = vmatpush1.bf16.msra.mxu0 0
    %1617 = vmatprep.subr.bf16.mxu0 0
    %1618 = vmatpush1.bf16.msra.mxu0 0
    %1619 = vmatprep.subr.bf16.mxu0 0
    %1620 = vmatpush1.bf16.msra.mxu0 0
    %1621 = vmatprep.subr.bf16.mxu0 0
    %1622 = vmatpush1.bf16.msra.mxu0 0
    %1623 = vmatprep.subr.bf16.mxu0 0
    %1624 = vmatpush1.bf16.msra.mxu0 0
    %1625 = vmatprep.subr.bf16.mxu0 0
    %1626 = vmatpush1.bf16.msra.mxu0 0
    %1627 = vmatprep.subr.bf16.mxu0 0
    %1628 = vmatpush1.bf16.msra.mxu0 0
    %1629 = vmatprep.subr.bf16.mxu0 0
    %1630 = vmatpush1.bf16.msra.mxu0 0
    %1631 = vmatprep.subr.bf16.mxu0 0
    %1632 = vmatpush1.bf16.msra.mxu0 0
    %1633 = vmatprep.mubr.bf16.mxu0 0
    %1634 = vmatmul.mubr.bf16.gmra.mrb[0].mxu0 %v1298
    %v1635 = vpop.f32.mrb[0].mxu0
    %v1636 = vadd.f32 %v1593, %v1635
    %v1637 = vpop.f32.mrb[0].mxu0
    %v1638 = vadd.f32 %v1595, %v1637
    %v1639 = vpop.f32.mrb[0].mxu0
    %v1640 = vadd.f32 %v1597, %v1639
    %v1641 = vpop.f32.mrb[0].mxu0
    %v1642 = vadd.f32 %v1599, %v1641
    %1643 = vdwg.mxu0
    %v1644 = vmax.f32 %v1464, 0.0
    %v1645 = vmax.f32 %v1466, 0.0
    %v1646 = vmax.f32 %v1636, 0.0
    %v1647 = vmax.f32 %v1638, 0.0
    %v1648 = vmax.f32 %v1468, 0.0
    %v1649 = vmax.f32 %v1470, 0.0
    %v1650 = vmax.f32 %v1640, 0.0
    %v1651 = vmax.f32 %v1642, 0.0
    %v1652 = vpack.c.bf16 %v1648, %v1644
    %v1653 = vpack.c.bf16 %v1649, %v1645
    %v1654 = vpack.c.bf16 %v1650, %v1646
    %v1655 = vpack.c.bf16 %v1651, %v1647
    %v1656 = vld [vmem:[#allocation4] sm:$0xff]
    %v1657 = vld [vmem:[#allocation4 + $0x8] sm:$0xff]
    %v1658 = vld [vmem:[#allocation4 + $0x10] sm:$0xff]
    %v1659 = vld [vmem:[#allocation4 + $0x18] sm:$0xff]
    %v1660 = vld [vmem:[#allocation4 + $0x20] sm:$0xff]
    %v1661 = vld [vmem:[#allocation4 + $0x28] sm:$0xff]
    %v1662 = vld [vmem:[#allocation4 + $0x30] sm:$0xff]
    %v1663 = vld [vmem:[#allocation4 + $0x38] sm:$0xff]
    %v1664 = vld [vmem:[#allocation4 + $0x40] sm:$0xff]
    %v1665 = vld [vmem:[#allocation4 + $0x48] sm:$0xff]
    %v1666 = vld [vmem:[#allocation4 + $0x50] sm:$0xff]
    %v1667 = vld [vmem:[#allocation4 + $0x58] sm:$0xff]
    %v1668 = vld [vmem:[#allocation4 + $0x60] sm:$0xff]
    %v1669 = vld [vmem:[#allocation4 + $0x68] sm:$0xff]
    %v1670 = vld [vmem:[#allocation4 + $0x70] sm:$0xff]
    %v1671 = vld [vmem:[#allocation4 + $0x78] sm:$0xff]
    %v1672 = vld [vmem:[#allocation4 + $0x80] sm:$0xff]
    %v1673 = vld [vmem:[#allocation4 + $0x88] sm:$0xff]
    %v1674 = vld [vmem:[#allocation4 + $0x90] sm:$0xff]
    %v1675 = vld [vmem:[#allocation4 + $0x98] sm:$0xff]
    %v1676 = vld [vmem:[#allocation4 + $0xa0] sm:$0xff]
    %v1677 = vld [vmem:[#allocation4 + $0xa8] sm:$0xff]
    %v1678 = vld [vmem:[#allocation4 + $0xb0] sm:$0xff]
    %v1679 = vld [vmem:[#allocation4 + $0xb8] sm:$0xff]
    %v1680 = vld [vmem:[#allocation4 + $0xc0] sm:$0xff]
    %v1681 = vld [vmem:[#allocation4 + $0xc8] sm:$0xff]
    %v1682 = vld [vmem:[#allocation4 + $0xd0] sm:$0xff]
    %v1683 = vld [vmem:[#allocation4 + $0xd8] sm:$0xff]
    %v1684 = vld [vmem:[#allocation4 + $0xe0] sm:$0xff]
    %v1685 = vld [vmem:[#allocation4 + $0xe8] sm:$0xff]
    %v1686 = vld [vmem:[#allocation4 + $0xf0] sm:$0xff]
    %v1687 = vld [vmem:[#allocation4 + $0xf8] sm:$0xff]
    %v1688 = vld [vmem:[#allocation4 + $0x100] sm:$0xff]
    %v1689 = vld [vmem:[#allocation4 + $0x108] sm:$0xff]
    %v1690 = vld [vmem:[#allocation4 + $0x110] sm:$0xff]
    %v1691 = vld [vmem:[#allocation4 + $0x118] sm:$0xff]
    %v1692 = vld [vmem:[#allocation4 + $0x120] sm:$0xff]
    %v1693 = vld [vmem:[#allocation4 + $0x128] sm:$0xff]
    %v1694 = vld [vmem:[#allocation4 + $0x130] sm:$0xff]
    %v1695 = vld [vmem:[#allocation4 + $0x138] sm:$0xff]
    %v1696 = vld [vmem:[#allocation4 + $0x140] sm:$0xff]
    %v1697 = vld [vmem:[#allocation4 + $0x148] sm:$0xff]
    %v1698 = vld [vmem:[#allocation4 + $0x150] sm:$0xff]
    %v1699 = vld [vmem:[#allocation4 + $0x158] sm:$0xff]
    %v1700 = vld [vmem:[#allocation4 + $0x160] sm:$0xff]
    %v1701 = vld [vmem:[#allocation4 + $0x168] sm:$0xff]
    %v1702 = vld [vmem:[#allocation4 + $0x170] sm:$0xff]
    %v1703 = vld [vmem:[#allocation4 + $0x178] sm:$0xff]
    %v1704 = vld [vmem:[#allocation4 + $0x180] sm:$0xff]
    %v1705 = vld [vmem:[#allocation4 + $0x188] sm:$0xff]
    %v1706 = vld [vmem:[#allocation4 + $0x190] sm:$0xff]
    %v1707 = vld [vmem:[#allocation4 + $0x198] sm:$0xff]
    %v1708 = vld [vmem:[#allocation4 + $0x1a0] sm:$0xff]
    %v1709 = vld [vmem:[#allocation4 + $0x1a8] sm:$0xff]
    %v1710 = vld [vmem:[#allocation4 + $0x1b0] sm:$0xff]
    %v1711 = vld [vmem:[#allocation4 + $0x1b8] sm:$0xff]
    %v1712 = vld [vmem:[#allocation4 + $0x1c0] sm:$0xff]
    %v1713 = vld [vmem:[#allocation4 + $0x1c8] sm:$0xff]
    %v1714 = vld [vmem:[#allocation4 + $0x1d0] sm:$0xff]
    %v1715 = vld [vmem:[#allocation4 + $0x1d8] sm:$0xff]
    %v1716 = vld [vmem:[#allocation4 + $0x1e0] sm:$0xff]
    %v1717 = vld [vmem:[#allocation4 + $0x1e8] sm:$0xff]
    %v1718 = vld [vmem:[#allocation4 + $0x1f0] sm:$0xff]
    %v1719 = vld [vmem:[#allocation4 + $0x1f8] sm:$0xff]
    %v1720 = vld [vmem:[#allocation4 + $0x200] sm:$0xff]
    %v1721 = vld [vmem:[#allocation4 + $0x208] sm:$0xff]
    %v1722 = vld [vmem:[#allocation4 + $0x210] sm:$0xff]
    %v1723 = vld [vmem:[#allocation4 + $0x218] sm:$0xff]
    %v1724 = vld [vmem:[#allocation4 + $0x220] sm:$0xff]
    %v1725 = vld [vmem:[#allocation4 + $0x228] sm:$0xff]
    %v1726 = vld [vmem:[#allocation4 + $0x230] sm:$0xff]
    %v1727 = vld [vmem:[#allocation4 + $0x238] sm:$0xff]
    %v1728 = vld [vmem:[#allocation4 + $0x240] sm:$0xff]
    %v1729 = vld [vmem:[#allocation4 + $0x248] sm:$0xff]
    %v1730 = vld [vmem:[#allocation4 + $0x250] sm:$0xff]
    %v1731 = vld [vmem:[#allocation4 + $0x258] sm:$0xff]
    %v1732 = vld [vmem:[#allocation4 + $0x260] sm:$0xff]
    %v1733 = vld [vmem:[#allocation4 + $0x268] sm:$0xff]
    %v1734 = vld [vmem:[#allocation4 + $0x270] sm:$0xff]
    %v1735 = vld [vmem:[#allocation4 + $0x278] sm:$0xff]
    %v1736 = vld [vmem:[#allocation4 + $0x280] sm:$0xff]
    %v1737 = vld [vmem:[#allocation4 + $0x288] sm:$0xff]
    %v1738 = vld [vmem:[#allocation4 + $0x290] sm:$0xff]
    %v1739 = vld [vmem:[#allocation4 + $0x298] sm:$0xff]
    %v1740 = vld [vmem:[#allocation4 + $0x2a0] sm:$0xff]
    %v1741 = vld [vmem:[#allocation4 + $0x2a8] sm:$0xff]
    %v1742 = vld [vmem:[#allocation4 + $0x2b0] sm:$0xff]
    %v1743 = vld [vmem:[#allocation4 + $0x2b8] sm:$0xff]
    %v1744 = vld [vmem:[#allocation4 + $0x2c0] sm:$0xff]
    %v1745 = vld [vmem:[#allocation4 + $0x2c8] sm:$0xff]
    %v1746 = vld [vmem:[#allocation4 + $0x2d0] sm:$0xff]
    %v1747 = vld [vmem:[#allocation4 + $0x2d8] sm:$0xff]
    %v1748 = vld [vmem:[#allocation4 + $0x2e0] sm:$0xff]
    %v1749 = vld [vmem:[#allocation4 + $0x2e8] sm:$0xff]
    %v1750 = vld [vmem:[#allocation4 + $0x2f0] sm:$0xff]
    %v1751 = vld [vmem:[#allocation4 + $0x2f8] sm:$0xff]
    %v1752 = vld [vmem:[#allocation4 + $0x300] sm:$0xff]
    %v1753 = vld [vmem:[#allocation4 + $0x308] sm:$0xff]
    %v1754 = vld [vmem:[#allocation4 + $0x310] sm:$0xff]
    %v1755 = vld [vmem:[#allocation4 + $0x318] sm:$0xff]
    %v1756 = vld [vmem:[#allocation4 + $0x320] sm:$0xff]
    %v1757 = vld [vmem:[#allocation4 + $0x328] sm:$0xff]
    %v1758 = vld [vmem:[#allocation4 + $0x330] sm:$0xff]
    %v1759 = vld [vmem:[#allocation4 + $0x338] sm:$0xff]
    %v1760 = vld [vmem:[#allocation4 + $0x340] sm:$0xff]
    %v1761 = vld [vmem:[#allocation4 + $0x348] sm:$0xff]
    %v1762 = vld [vmem:[#allocation4 + $0x350] sm:$0xff]
    %v1763 = vld [vmem:[#allocation4 + $0x358] sm:$0xff]
    %v1764 = vld [vmem:[#allocation4 + $0x360] sm:$0xff]
    %v1765 = vld [vmem:[#allocation4 + $0x368] sm:$0xff]
    %v1766 = vld [vmem:[#allocation4 + $0x370] sm:$0xff]
    %v1767 = vld [vmem:[#allocation4 + $0x378] sm:$0xff]
    %v1768 = vld [vmem:[#allocation4 + $0x380] sm:$0xff]
    %v1769 = vld [vmem:[#allocation4 + $0x388] sm:$0xff]
    %v1770 = vld [vmem:[#allocation4 + $0x390] sm:$0xff]
    %v1771 = vld [vmem:[#allocation4 + $0x398] sm:$0xff]
    %v1772 = vld [vmem:[#allocation4 + $0x3a0] sm:$0xff]
    %v1773 = vld [vmem:[#allocation4 + $0x3a8] sm:$0xff]
    %v1774 = vld [vmem:[#allocation4 + $0x3b0] sm:$0xff]
    %v1775 = vld [vmem:[#allocation4 + $0x3b8] sm:$0xff]
    %v1776 = vld [vmem:[#allocation4 + $0x3c0] sm:$0xff]
    %v1777 = vld [vmem:[#allocation4 + $0x3c8] sm:$0xff]
    %v1778 = vld [vmem:[#allocation4 + $0x3d0] sm:$0xff]
    %v1779 = vld [vmem:[#allocation4 + $0x3d8] sm:$0xff]
    %v1780 = vld [vmem:[#allocation4 + $0x3e0] sm:$0xff]
    %v1781 = vld [vmem:[#allocation4 + $0x3e8] sm:$0xff]
    %v1782 = vld [vmem:[#allocation4 + $0x3f0] sm:$0xff]
    %v1783 = vld [vmem:[#allocation4 + $0x3f8] sm:$0xff]
    %v1784 = vld [vmem:[%s4] sm:$0xf]
    %v1786 = vlaneseq
    %v1787 = vshrl.u32 %v1786, 7
    %v1788 = vsub.s32 0, %v1787
    %v1789 = vrot.slane %v1784, %v1788
    %v1790 = vlaneseq
    %v1791 = vshrl.u32 %v1790, 7
    %v1792 = vsub.s32 1, %v1791
    %v1793 = vrot.slane %v1784, %v1792
    %v1794 = vlaneseq
    %v1795 = vshrl.u32 %v1794, 7
    %v1796 = vsub.s32 2, %v1795
    %v1797 = vrot.slane %v1784, %v1796
    %v1798 = vlaneseq
    %v1799 = vshrl.u32 %v1798, 7
    %v1800 = vsub.s32 3, %v1799
    %v1801 = vrot.slane %v1784, %v1800
    %v1934 = vunpack.c.l.b16 %v1656
    %v1935 = vunpack.c.h.b16 %v1656
    %v1936 = vunpack.c.l.b16 %v1657
    %v1937 = vunpack.c.h.b16 %v1657
    %v1938 = vunpack.c.l.b16 %v1658
    %v1939 = vunpack.c.h.b16 %v1658
    %v1940 = vunpack.c.l.b16 %v1659
    %v1941 = vunpack.c.h.b16 %v1659
    %v1942 = vunpack.c.l.b16 %v1660
    %v1943 = vunpack.c.h.b16 %v1660
    %v1944 = vunpack.c.l.b16 %v1661
    %v1945 = vunpack.c.h.b16 %v1661
    %v1946 = vunpack.c.l.b16 %v1662
    %v1947 = vunpack.c.h.b16 %v1662
    %v1948 = vunpack.c.l.b16 %v1663
    %v1949 = vunpack.c.h.b16 %v1663
    %v1950 = vunpack.c.l.b16 %v1664
    %v1951 = vunpack.c.h.b16 %v1664
    %v1952 = vunpack.c.l.b16 %v1665
    %v1953 = vunpack.c.h.b16 %v1665
    %v1954 = vunpack.c.l.b16 %v1666
    %v1955 = vunpack.c.h.b16 %v1666
    %v1956 = vunpack.c.l.b16 %v1667
    %v1957 = vunpack.c.h.b16 %v1667
    %v1958 = vunpack.c.l.b16 %v1668
    %v1959 = vunpack.c.h.b16 %v1668
    %v1960 = vunpack.c.l.b16 %v1669
    %v1961 = vunpack.c.h.b16 %v1669
    %v1962 = vunpack.c.l.b16 %v1670
    %v1963 = vunpack.c.h.b16 %v1670
    %v1964 = vunpack.c.l.b16 %v1671
    %v1965 = vunpack.c.h.b16 %v1671
    %v1966 = vunpack.c.l.b16 %v1672
    %v1967 = vunpack.c.h.b16 %v1672
    %v1968 = vunpack.c.l.b16 %v1673
    %v1969 = vunpack.c.h.b16 %v1673
    %v1970 = vunpack.c.l.b16 %v1674
    %v1971 = vunpack.c.h.b16 %v1674
    %v1972 = vunpack.c.l.b16 %v1675
    %v1973 = vunpack.c.h.b16 %v1675
    %v1974 = vunpack.c.l.b16 %v1676
    %v1975 = vunpack.c.h.b16 %v1676
    %v1976 = vunpack.c.l.b16 %v1677
    %v1977 = vunpack.c.h.b16 %v1677
    %v1978 = vunpack.c.l.b16 %v1678
    %v1979 = vunpack.c.h.b16 %v1678
    %v1980 = vunpack.c.l.b16 %v1679
    %v1981 = vunpack.c.h.b16 %v1679
    %v1982 = vunpack.c.l.b16 %v1680
    %v1983 = vunpack.c.h.b16 %v1680
    %v1984 = vunpack.c.l.b16 %v1681
    %v1985 = vunpack.c.h.b16 %v1681
    %v1986 = vunpack.c.l.b16 %v1682
    %v1987 = vunpack.c.h.b16 %v1682
    %v1988 = vunpack.c.l.b16 %v1683
    %v1989 = vunpack.c.h.b16 %v1683
    %v1990 = vunpack.c.l.b16 %v1684
    %v1991 = vunpack.c.h.b16 %v1684
    %v1992 = vunpack.c.l.b16 %v1685
    %v1993 = vunpack.c.h.b16 %v1685
    %v1994 = vunpack.c.l.b16 %v1686
    %v1995 = vunpack.c.h.b16 %v1686
    %v1996 = vunpack.c.l.b16 %v1687
    %v1997 = vunpack.c.h.b16 %v1687
    %v1998 = vunpack.c.l.b16 %v1688
    %v1999 = vunpack.c.h.b16 %v1688
    %v2000 = vunpack.c.l.b16 %v1689
    %v2001 = vunpack.c.h.b16 %v1689
    %v2002 = vunpack.c.l.b16 %v1690
    %v2003 = vunpack.c.h.b16 %v1690
    %v2004 = vunpack.c.l.b16 %v1691
    %v2005 = vunpack.c.h.b16 %v1691
    %v2006 = vunpack.c.l.b16 %v1692
    %v2007 = vunpack.c.h.b16 %v1692
    %v2008 = vunpack.c.l.b16 %v1693
    %v2009 = vunpack.c.h.b16 %v1693
    %v2010 = vunpack.c.l.b16 %v1694
    %v2011 = vunpack.c.h.b16 %v1694
    %v2012 = vunpack.c.l.b16 %v1695
    %v2013 = vunpack.c.h.b16 %v1695
    %v2014 = vunpack.c.l.b16 %v1696
    %v2015 = vunpack.c.h.b16 %v1696
    %v2016 = vunpack.c.l.b16 %v1697
    %v2017 = vunpack.c.h.b16 %v1697
    %v2018 = vunpack.c.l.b16 %v1698
    %v2019 = vunpack.c.h.b16 %v1698
    %v2020 = vunpack.c.l.b16 %v1699
    %v2021 = vunpack.c.h.b16 %v1699
    %v2022 = vunpack.c.l.b16 %v1700
    %v2023 = vunpack.c.h.b16 %v1700
    %v2024 = vunpack.c.l.b16 %v1701
    %v2025 = vunpack.c.h.b16 %v1701
    %v2026 = vunpack.c.l.b16 %v1702
    %v2027 = vunpack.c.h.b16 %v1702
    %v2028 = vunpack.c.l.b16 %v1703
    %v2029 = vunpack.c.h.b16 %v1703
    %v2030 = vunpack.c.l.b16 %v1704
    %v2031 = vunpack.c.h.b16 %v1704
    %v2032 = vunpack.c.l.b16 %v1705
    %v2033 = vunpack.c.h.b16 %v1705
    %v2034 = vunpack.c.l.b16 %v1706
    %v2035 = vunpack.c.h.b16 %v1706
    %v2036 = vunpack.c.l.b16 %v1707
    %v2037 = vunpack.c.h.b16 %v1707
    %v2038 = vunpack.c.l.b16 %v1708
    %v2039 = vunpack.c.h.b16 %v1708
    %v2040 = vunpack.c.l.b16 %v1709
    %v2041 = vunpack.c.h.b16 %v1709
    %v2042 = vunpack.c.l.b16 %v1710
    %v2043 = vunpack.c.h.b16 %v1710
    %v2044 = vunpack.c.l.b16 %v1711
    %v2045 = vunpack.c.h.b16 %v1711
    %v2046 = vunpack.c.l.b16 %v1712
    %v2047 = vunpack.c.h.b16 %v1712
    %v2048 = vunpack.c.l.b16 %v1713
    %v2049 = vunpack.c.h.b16 %v1713
    %v2050 = vunpack.c.l.b16 %v1714
    %v2051 = vunpack.c.h.b16 %v1714
    %v2052 = vunpack.c.l.b16 %v1715
    %v2053 = vunpack.c.h.b16 %v1715
    %v2054 = vunpack.c.l.b16 %v1716
    %v2055 = vunpack.c.h.b16 %v1716
    %v2056 = vunpack.c.l.b16 %v1717
    %v2057 = vunpack.c.h.b16 %v1717
    %v2058 = vunpack.c.l.b16 %v1718
    %v2059 = vunpack.c.h.b16 %v1718
    %v2060 = vunpack.c.l.b16 %v1719
    %v2061 = vunpack.c.h.b16 %v1719
    %v2062 = vunpack.c.l.b16 %v1720
    %v2063 = vunpack.c.h.b16 %v1720
    %v2064 = vunpack.c.l.b16 %v1721
    %v2065 = vunpack.c.h.b16 %v1721
    %v2066 = vunpack.c.l.b16 %v1722
    %v2067 = vunpack.c.h.b16 %v1722
    %v2068 = vunpack.c.l.b16 %v1723
    %v2069 = vunpack.c.h.b16 %v1723
    %v2070 = vunpack.c.l.b16 %v1724
    %v2071 = vunpack.c.h.b16 %v1724
    %v2072 = vunpack.c.l.b16 %v1725
    %v2073 = vunpack.c.h.b16 %v1725
    %v2074 = vunpack.c.l.b16 %v1726
    %v2075 = vunpack.c.h.b16 %v1726
    %v2076 = vunpack.c.l.b16 %v1727
    %v2077 = vunpack.c.h.b16 %v1727
    %v2078 = vunpack.c.l.b16 %v1728
    %v2079 = vunpack.c.h.b16 %v1728
    %v2080 = vunpack.c.l.b16 %v1729
    %v2081 = vunpack.c.h.b16 %v1729
    %v2082 = vunpack.c.l.b16 %v1730
    %v2083 = vunpack.c.h.b16 %v1730
    %v2084 = vunpack.c.l.b16 %v1731
    %v2085 = vunpack.c.h.b16 %v1731
    %v2086 = vunpack.c.l.b16 %v1732
    %v2087 = vunpack.c.h.b16 %v1732
    %v2088 = vunpack.c.l.b16 %v1733
    %v2089 = vunpack.c.h.b16 %v1733
    %v2090 = vunpack.c.l.b16 %v1734
    %v2091 = vunpack.c.h.b16 %v1734
    %v2092 = vunpack.c.l.b16 %v1735
    %v2093 = vunpack.c.h.b16 %v1735
    %v2094 = vunpack.c.l.b16 %v1736
    %v2095 = vunpack.c.h.b16 %v1736
    %v2096 = vunpack.c.l.b16 %v1737
    %v2097 = vunpack.c.h.b16 %v1737
    %v2098 = vunpack.c.l.b16 %v1738
    %v2099 = vunpack.c.h.b16 %v1738
    %v2100 = vunpack.c.l.b16 %v1739
    %v2101 = vunpack.c.h.b16 %v1739
    %v2102 = vunpack.c.l.b16 %v1740
    %v2103 = vunpack.c.h.b16 %v1740
    %v2104 = vunpack.c.l.b16 %v1741
    %v2105 = vunpack.c.h.b16 %v1741
    %v2106 = vunpack.c.l.b16 %v1742
    %v2107 = vunpack.c.h.b16 %v1742
    %v2108 = vunpack.c.l.b16 %v1743
    %v2109 = vunpack.c.h.b16 %v1743
    %v2110 = vunpack.c.l.b16 %v1744
    %v2111 = vunpack.c.h.b16 %v1744
    %v2112 = vunpack.c.l.b16 %v1745
    %v2113 = vunpack.c.h.b16 %v1745
    %v2114 = vunpack.c.l.b16 %v1746
    %v2115 = vunpack.c.h.b16 %v1746
    %v2116 = vunpack.c.l.b16 %v1747
    %v2117 = vunpack.c.h.b16 %v1747
    %v2118 = vunpack.c.l.b16 %v1748
    %v2119 = vunpack.c.h.b16 %v1748
    %v2120 = vunpack.c.l.b16 %v1749
    %v2121 = vunpack.c.h.b16 %v1749
    %v2122 = vunpack.c.l.b16 %v1750
    %v2123 = vunpack.c.h.b16 %v1750
    %v2124 = vunpack.c.l.b16 %v1751
    %v2125 = vunpack.c.h.b16 %v1751
    %v2126 = vunpack.c.l.b16 %v1752
    %v2127 = vunpack.c.h.b16 %v1752
    %v2128 = vunpack.c.l.b16 %v1753
    %v2129 = vunpack.c.h.b16 %v1753
    %v2130 = vunpack.c.l.b16 %v1754
    %v2131 = vunpack.c.h.b16 %v1754
    %v2132 = vunpack.c.l.b16 %v1755
    %v2133 = vunpack.c.h.b16 %v1755
    %v2134 = vunpack.c.l.b16 %v1756
    %v2135 = vunpack.c.h.b16 %v1756
    %v2136 = vunpack.c.l.b16 %v1757
    %v2137 = vunpack.c.h.b16 %v1757
    %v2138 = vunpack.c.l.b16 %v1758
    %v2139 = vunpack.c.h.b16 %v1758
    %v2140 = vunpack.c.l.b16 %v1759
    %v2141 = vunpack.c.h.b16 %v1759
    %v2142 = vunpack.c.l.b16 %v1760
    %v2143 = vunpack.c.h.b16 %v1760
    %v2144 = vunpack.c.l.b16 %v1761
    %v2145 = vunpack.c.h.b16 %v1761
    %v2146 = vunpack.c.l.b16 %v1762
    %v2147 = vunpack.c.h.b16 %v1762
    %v2148 = vunpack.c.l.b16 %v1763
    %v2149 = vunpack.c.h.b16 %v1763
    %v2150 = vunpack.c.l.b16 %v1764
    %v2151 = vunpack.c.h.b16 %v1764
    %v2152 = vunpack.c.l.b16 %v1765
    %v2153 = vunpack.c.h.b16 %v1765
    %v2154 = vunpack.c.l.b16 %v1766
    %v2155 = vunpack.c.h.b16 %v1766
    %v2156 = vunpack.c.l.b16 %v1767
    %v2157 = vunpack.c.h.b16 %v1767
    %v2158 = vunpack.c.l.b16 %v1768
    %v2159 = vunpack.c.h.b16 %v1768
    %v2160 = vunpack.c.l.b16 %v1769
    %v2161 = vunpack.c.h.b16 %v1769
    %v2162 = vunpack.c.l.b16 %v1770
    %v2163 = vunpack.c.h.b16 %v1770
    %v2164 = vunpack.c.l.b16 %v1771
    %v2165 = vunpack.c.h.b16 %v1771
    %v2166 = vunpack.c.l.b16 %v1772
    %v2167 = vunpack.c.h.b16 %v1772
    %v2168 = vunpack.c.l.b16 %v1773
    %v2169 = vunpack.c.h.b16 %v1773
    %v2170 = vunpack.c.l.b16 %v1774
    %v2171 = vunpack.c.h.b16 %v1774
    %v2172 = vunpack.c.l.b16 %v1775
    %v2173 = vunpack.c.h.b16 %v1775
    %v2174 = vunpack.c.l.b16 %v1776
    %v2175 = vunpack.c.h.b16 %v1776
    %v2176 = vunpack.c.l.b16 %v1777
    %v2177 = vunpack.c.h.b16 %v1777
    %v2178 = vunpack.c.l.b16 %v1778
    %v2179 = vunpack.c.h.b16 %v1778
    %v2180 = vunpack.c.l.b16 %v1779
    %v2181 = vunpack.c.h.b16 %v1779
    %v2182 = vunpack.c.l.b16 %v1780
    %v2183 = vunpack.c.h.b16 %v1780
    %v2184 = vunpack.c.l.b16 %v1781
    %v2185 = vunpack.c.h.b16 %v1781
    %v2186 = vunpack.c.l.b16 %v1782
    %v2187 = vunpack.c.h.b16 %v1782
    %v2188 = vunpack.c.l.b16 %v1783
    %v2189 = vunpack.c.h.b16 %v1783
    %v2190 = vpack.c.b16 %v1938, %v1934
    %v2191 = vpack.c.b16 %v1939, %v1935
    %v2192 = vpack.c.b16 %v1940, %v1936
    %v2193 = vpack.c.b16 %v1941, %v1937
    %v2194 = vpack.c.b16 %v1946, %v1942
    %v2195 = vpack.c.b16 %v1947, %v1943
    %v2196 = vpack.c.b16 %v1948, %v1944
    %v2197 = vpack.c.b16 %v1949, %v1945
    %v2198 = vpack.c.b16 %v1954, %v1950
    %v2199 = vpack.c.b16 %v1955, %v1951
    %v2200 = vpack.c.b16 %v1956, %v1952
    %v2201 = vpack.c.b16 %v1957, %v1953
    %v2202 = vpack.c.b16 %v1962, %v1958
    %v2203 = vpack.c.b16 %v1963, %v1959
    %v2204 = vpack.c.b16 %v1964, %v1960
    %v2205 = vpack.c.b16 %v1965, %v1961
    %v2206 = vpack.c.b16 %v1970, %v1966
    %v2207 = vpack.c.b16 %v1971, %v1967
    %v2208 = vpack.c.b16 %v1972, %v1968
    %v2209 = vpack.c.b16 %v1973, %v1969
    %v2210 = vpack.c.b16 %v1978, %v1974
    %v2211 = vpack.c.b16 %v1979, %v1975
    %v2212 = vpack.c.b16 %v1980, %v1976
    %v2213 = vpack.c.b16 %v1981, %v1977
    %v2214 = vpack.c.b16 %v1986, %v1982
    %v2215 = vpack.c.b16 %v1987, %v1983
    %v2216 = vpack.c.b16 %v1988, %v1984
    %v2217 = vpack.c.b16 %v1989, %v1985
    %v2218 = vpack.c.b16 %v1994, %v1990
    %v2219 = vpack.c.b16 %v1995, %v1991
    %v2220 = vpack.c.b16 %v1996, %v1992
    %v2221 = vpack.c.b16 %v1997, %v1993
    %v2222 = vpack.c.b16 %v2002, %v1998
    %v2223 = vpack.c.b16 %v2003, %v1999
    %v2224 = vpack.c.b16 %v2004, %v2000
    %v2225 = vpack.c.b16 %v2005, %v2001
    %v2226 = vpack.c.b16 %v2010, %v2006
    %v2227 = vpack.c.b16 %v2011, %v2007
    %v2228 = vpack.c.b16 %v2012, %v2008
    %v2229 = vpack.c.b16 %v2013, %v2009
    %v2230 = vpack.c.b16 %v2018, %v2014
    %v2231 = vpack.c.b16 %v2019, %v2015
    %v2232 = vpack.c.b16 %v2020, %v2016
    %v2233 = vpack.c.b16 %v2021, %v2017
    %v2234 = vpack.c.b16 %v2026, %v2022
    %v2235 = vpack.c.b16 %v2027, %v2023
    %v2236 = vpack.c.b16 %v2028, %v2024
    %v2237 = vpack.c.b16 %v2029, %v2025
    %v2238 = vpack.c.b16 %v2034, %v2030
    %v2239 = vpack.c.b16 %v2035, %v2031
    %v2240 = vpack.c.b16 %v2036, %v2032
    %v2241 = vpack.c.b16 %v2037, %v2033
    %v2242 = vpack.c.b16 %v2042, %v2038
    %v2243 = vpack.c.b16 %v2043, %v2039
    %v2244 = vpack.c.b16 %v2044, %v2040
    %v2245 = vpack.c.b16 %v2045, %v2041
    %v2246 = vpack.c.b16 %v2050, %v2046
    %v2247 = vpack.c.b16 %v2051, %v2047
    %v2248 = vpack.c.b16 %v2052, %v2048
    %v2249 = vpack.c.b16 %v2053, %v2049
    %v2250 = vpack.c.b16 %v2058, %v2054
    %v2251 = vpack.c.b16 %v2059, %v2055
    %v2252 = vpack.c.b16 %v2060, %v2056
    %v2253 = vpack.c.b16 %v2061, %v2057
    %v2254 = vpack.c.b16 %v2066, %v2062
    %v2255 = vpack.c.b16 %v2067, %v2063
    %v2256 = vpack.c.b16 %v2068, %v2064
    %v2257 = vpack.c.b16 %v2069, %v2065
    %v2258 = vpack.c.b16 %v2074, %v2070
    %v2259 = vpack.c.b16 %v2075, %v2071
    %v2260 = vpack.c.b16 %v2076, %v2072
    %v2261 = vpack.c.b16 %v2077, %v2073
    %v2262 = vpack.c.b16 %v2082, %v2078
    %v2263 = vpack.c.b16 %v2083, %v2079
    %v2264 = vpack.c.b16 %v2084, %v2080
    %v2265 = vpack.c.b16 %v2085, %v2081
    %v2266 = vpack.c.b16 %v2090, %v2086
    %v2267 = vpack.c.b16 %v2091, %v2087
    %v2268 = vpack.c.b16 %v2092, %v2088
    %v2269 = vpack.c.b16 %v2093, %v2089
    %v2270 = vpack.c.b16 %v2098, %v2094
    %v2271 = vpack.c.b16 %v2099, %v2095
    %v2272 = vpack.c.b16 %v2100, %v2096
    %v2273 = vpack.c.b16 %v2101, %v2097
    %v2274 = vpack.c.b16 %v2106, %v2102
    %v2275 = vpack.c.b16 %v2107, %v2103
    %v2276 = vpack.c.b16 %v2108, %v2104
    %v2277 = vpack.c.b16 %v2109, %v2105
    %v2278 = vpack.c.b16 %v2114, %v2110
    %v2279 = vpack.c.b16 %v2115, %v2111
    %v2280 = vpack.c.b16 %v2116, %v2112
    %v2281 = vpack.c.b16 %v2117, %v2113
    %v2282 = vpack.c.b16 %v2122, %v2118
    %v2283 = vpack.c.b16 %v2123, %v2119
    %v2284 = vpack.c.b16 %v2124, %v2120
    %v2285 = vpack.c.b16 %v2125, %v2121
    %v2286 = vpack.c.b16 %v2130, %v2126
    %v2287 = vpack.c.b16 %v2131, %v2127
    %v2288 = vpack.c.b16 %v2132, %v2128
    %v2289 = vpack.c.b16 %v2133, %v2129
    %v2290 = vpack.c.b16 %v2138, %v2134
    %v2291 = vpack.c.b16 %v2139, %v2135
    %v2292 = vpack.c.b16 %v2140, %v2136
    %v2293 = vpack.c.b16 %v2141, %v2137
    %v2294 = vpack.c.b16 %v2146, %v2142
    %v2295 = vpack.c.b16 %v2147, %v2143
    %v2296 = vpack.c.b16 %v2148, %v2144
    %v2297 = vpack.c.b16 %v2149, %v2145
    %v2298 = vpack.c.b16 %v2154, %v2150
    %v2299 = vpack.c.b16 %v2155, %v2151
    %v2300 = vpack.c.b16 %v2156, %v2152
    %v2301 = vpack.c.b16 %v2157, %v2153
    %v2302 = vpack.c.b16 %v2162, %v2158
    %v2303 = vpack.c.b16 %v2163, %v2159
    %v2304 = vpack.c.b16 %v2164, %v2160
    %v2305 = vpack.c.b16 %v2165, %v2161
    %v2306 = vpack.c.b16 %v2170, %v2166
    %v2307 = vpack.c.b16 %v2171, %v2167
    %v2308 = vpack.c.b16 %v2172, %v2168
    %v2309 = vpack.c.b16 %v2173, %v2169
    %v2310 = vpack.c.b16 %v2178, %v2174
    %v2311 = vpack.c.b16 %v2179, %v2175
    %v2312 = vpack.c.b16 %v2180, %v2176
    %v2313 = vpack.c.b16 %v2181, %v2177
    %v2314 = vpack.c.b16 %v2186, %v2182
    %v2315 = vpack.c.b16 %v2187, %v2183
    %v2316 = vpack.c.b16 %v2188, %v2184
    %v2317 = vpack.c.b16 %v2189, %v2185
    %2446 = vmatprep.subr.bf16.mxu0 %v2191
    %2447 = vmatpush1.bf16.msra.mxu0 %v2190
    %2448 = vmatprep.subr.bf16.mxu0 %v2195
    %2449 = vmatpush1.bf16.msra.mxu0 %v2194
    %2450 = vmatprep.subr.bf16.mxu0 %v2199
    %2451 = vmatpush1.bf16.msra.mxu0 %v2198
    %2452 = vmatprep.subr.bf16.mxu0 %v2203
    %2453 = vmatpush1.bf16.msra.mxu0 %v2202
    %2454 = vmatprep.subr.bf16.mxu0 %v2207
    %2455 = vmatpush1.bf16.msra.mxu0 %v2206
    %2456 = vmatprep.subr.bf16.mxu0 %v2211
    %2457 = vmatpush1.bf16.msra.mxu0 %v2210
    %2458 = vmatprep.subr.bf16.mxu0 %v2215
    %2459 = vmatpush1.bf16.msra.mxu0 %v2214
    %2460 = vmatprep.subr.bf16.mxu0 %v2219
    %2461 = vmatpush1.bf16.msra.mxu0 %v2218
    %2462 = vmatprep.subr.bf16.mxu0 %v2223
    %2463 = vmatpush1.bf16.msra.mxu0 %v2222
    %2464 = vmatprep.subr.bf16.mxu0 %v2227
    %2465 = vmatpush1.bf16.msra.mxu0 %v2226
    %2466 = vmatprep.subr.bf16.mxu0 %v2231
    %2467 = vmatpush1.bf16.msra.mxu0 %v2230
    %2468 = vmatprep.subr.bf16.mxu0 %v2235
    %2469 = vmatpush1.bf16.msra.mxu0 %v2234
    %2470 = vmatprep.subr.bf16.mxu0 %v2239
    %2471 = vmatpush1.bf16.msra.mxu0 %v2238
    %2472 = vmatprep.subr.bf16.mxu0 %v2243
    %2473 = vmatpush1.bf16.msra.mxu0 %v2242
    %2474 = vmatprep.subr.bf16.mxu0 %v2247
    %2475 = vmatpush1.bf16.msra.mxu0 %v2246
    %2476 = vmatprep.subr.bf16.mxu0 %v2251
    %2477 = vmatpush1.bf16.msra.mxu0 %v2250
    %2478 = vmatprep.mubr.bf16.mxu0 %v1653
    %2479 = vmatmul.mubr.bf16.gmra.mrb[0].mxu0 %v1652
    %v2480 = vpop.f32.mrb[0].mxu0
    %v2481 = vadd.f32 %v1789, %v2480
    %v2482 = vpop.f32.mrb[0].mxu0
    %v2483 = vadd.f32 %v1793, %v2482
    %v2484 = vpop.f32.mrb[0].mxu0
    %v2485 = vadd.f32 %v1789, %v2484
    %v2486 = vpop.f32.mrb[0].mxu0
    %v2487 = vadd.f32 %v1793, %v2486
    %2488 = vdwg.mxu0
    %2489 = vmatprep.subr.bf16.mxu0 %v2255
    %2490 = vmatpush1.bf16.msra.mxu0 %v2254
    %2491 = vmatprep.subr.bf16.mxu0 %v2259
    %2492 = vmatpush1.bf16.msra.mxu0 %v2258
    %2493 = vmatprep.subr.bf16.mxu0 %v2263
    %2494 = vmatpush1.bf16.msra.mxu0 %v2262
    %2495 = vmatprep.subr.bf16.mxu0 %v2267
    %2496 = vmatpush1.bf16.msra.mxu0 %v2266
    %2497 = vmatprep.subr.bf16.mxu0 %v2271
    %2498 = vmatpush1.bf16.msra.mxu0 %v2270
    %2499 = vmatprep.subr.bf16.mxu0 %v2275
    %2500 = vmatpush1.bf16.msra.mxu0 %v2274
    %2501 = vmatprep.subr.bf16.mxu0 %v2279
    %2502 = vmatpush1.bf16.msra.mxu0 %v2278
    %2503 = vmatprep.subr.bf16.mxu0 %v2283
    %2504 = vmatpush1.bf16.msra.mxu0 %v2282
    %2505 = vmatprep.subr.bf16.mxu0 %v2287
    %2506 = vmatpush1.bf16.msra.mxu0 %v2286
    %2507 = vmatprep.subr.bf16.mxu0 %v2291
    %2508 = vmatpush1.bf16.msra.mxu0 %v2290
    %2509 = vmatprep.subr.bf16.mxu0 %v2295
    %2510 = vmatpush1.bf16.msra.mxu0 %v2294
    %2511 = vmatprep.subr.bf16.mxu0 %v2299
    %2512 = vmatpush1.bf16.msra.mxu0 %v2298
    %2513 = vmatprep.subr.bf16.mxu0 %v2303
    %2514 = vmatpush1.bf16.msra.mxu0 %v2302
    %2515 = vmatprep.subr.bf16.mxu0 %v2307
    %2516 = vmatpush1.bf16.msra.mxu0 %v2306
    %2517 = vmatprep.subr.bf16.mxu0 %v2311
    %2518 = vmatpush1.bf16.msra.mxu0 %v2310
    %2519 = vmatprep.subr.bf16.mxu0 %v2315
    %2520 = vmatpush1.bf16.msra.mxu0 %v2314
    %2521 = vmatprep.mubr.bf16.mxu0 %v1655
    %2522 = vmatmul.mubr.bf16.gmra.mrb[0].mxu0 %v1654
    %v2523 = vpop.f32.mrb[0].mxu0
    %v2524 = vadd.f32 %v2481, %v2523
    %v2525 = vpop.f32.mrb[0].mxu0
    %v2526 = vadd.f32 %v2483, %v2525
    %v2527 = vpop.f32.mrb[0].mxu0
    %v2528 = vadd.f32 %v2485, %v2527
    %v2529 = vpop.f32.mrb[0].mxu0
    %v2530 = vadd.f32 %v2487, %v2529
    %2531 = vdwg.mxu0
    %2532 = vmatprep.subr.bf16.mxu0 %v2193
    %2533 = vmatpush1.bf16.msra.mxu0 %v2192
    %2534 = vmatprep.subr.bf16.mxu0 %v2197
    %2535 = vmatpush1.bf16.msra.mxu0 %v2196
    %2536 = vmatprep.subr.bf16.mxu0 %v2201
    %2537 = vmatpush1.bf16.msra.mxu0 %v2200
    %2538 = vmatprep.subr.bf16.mxu0 %v2205
    %2539 = vmatpush1.bf16.msra.mxu0 %v2204
    %2540 = vmatprep.subr.bf16.mxu0 %v2209
    %2541 = vmatpush1.bf16.msra.mxu0 %v2208
    %2542 = vmatprep.subr.bf16.mxu0 %v2213
    %2543 = vmatpush1.bf16.msra.mxu0 %v2212
    %2544 = vmatprep.subr.bf16.mxu0 %v2217
    %2545 = vmatpush1.bf16.msra.mxu0 %v2216
    %2546 = vmatprep.subr.bf16.mxu0 %v2221
    %2547 = vmatpush1.bf16.msra.mxu0 %v2220
    %2548 = vmatprep.subr.bf16.mxu0 %v2225
    %2549 = vmatpush1.bf16.msra.mxu0 %v2224
    %2550 = vmatprep.subr.bf16.mxu0 %v2229
    %2551 = vmatpush1.bf16.msra.mxu0 %v2228
    %2552 = vmatprep.subr.bf16.mxu0 %v2233
    %2553 = vmatpush1.bf16.msra.mxu0 %v2232
    %2554 = vmatprep.subr.bf16.mxu0 %v2237
    %2555 = vmatpush1.bf16.msra.mxu0 %v2236
    %2556 = vmatprep.subr.bf16.mxu0 %v2241
    %2557 = vmatpush1.bf16.msra.mxu0 %v2240
    %2558 = vmatprep.subr.bf16.mxu0 %v2245
    %2559 = vmatpush1.bf16.msra.mxu0 %v2244
    %2560 = vmatprep.subr.bf16.mxu0 %v2249
    %2561 = vmatpush1.bf16.msra.mxu0 %v2248
    %2562 = vmatprep.subr.bf16.mxu0 %v2253
    %2563 = vmatpush1.bf16.msra.mxu0 %v2252
    %2564 = vmatprep.mubr.bf16.mxu0 %v1653
    %2565 = vmatmul.mubr.bf16.gmra.mrb[0].mxu0 %v1652
    %v2566 = vpop.f32.mrb[0].mxu0
    %v2567 = vadd.f32 %v1797, %v2566
    %v2568 = vpop.f32.mrb[0].mxu0
    %v2569 = vadd.f32 %v1801, %v2568
    %v2570 = vpop.f32.mrb[0].mxu0
    %v2571 = vadd.f32 %v1797, %v2570
    %v2572 = vpop.f32.mrb[0].mxu0
    %v2573 = vadd.f32 %v1801, %v2572
    %2574 = vdwg.mxu0
    %2575 = vmatprep.subr.bf16.mxu0 %v2257
    %2576 = vmatpush1.bf16.msra.mxu0 %v2256
    %2577 = vmatprep.subr.bf16.mxu0 %v2261
    %2578 = vmatpush1.bf16.msra.mxu0 %v2260
    %2579 = vmatprep.subr.bf16.mxu0 %v2265
    %2580 = vmatpush1.bf16.msra.mxu0 %v2264
    %2581 = vmatprep.subr.bf16.mxu0 %v2269
    %2582 = vmatpush1.bf16.msra.mxu0 %v2268
    %2583 = vmatprep.subr.bf16.mxu0 %v2273
    %2584 = vmatpush1.bf16.msra.mxu0 %v2272
    %2585 = vmatprep.subr.bf16.mxu0 %v2277
    %2586 = vmatpush1.bf16.msra.mxu0 %v2276
    %2587 = vmatprep.subr.bf16.mxu0 %v2281
    %2588 = vmatpush1.bf16.msra.mxu0 %v2280
    %2589 = vmatprep.subr.bf16.mxu0 %v2285
    %2590 = vmatpush1.bf16.msra.mxu0 %v2284
    %2591 = vmatprep.subr.bf16.mxu0 %v2289
    %2592 = vmatpush1.bf16.msra.mxu0 %v2288
    %2593 = vmatprep.subr.bf16.mxu0 %v2293
    %2594 = vmatpush1.bf16.msra.mxu0 %v2292
    %2595 = vmatprep.subr.bf16.mxu0 %v2297
    %2596 = vmatpush1.bf16.msra.mxu0 %v2296
    %2597 = vmatprep.subr.bf16.mxu0 %v2301
    %2598 = vmatpush1.bf16.msra.mxu0 %v2300
    %2599 = vmatprep.subr.bf16.mxu0 %v2305
    %2600 = vmatpush1.bf16.msra.mxu0 %v2304
    %2601 = vmatprep.subr.bf16.mxu0 %v2309
    %2602 = vmatpush1.bf16.msra.mxu0 %v2308
    %2603 = vmatprep.subr.bf16.mxu0 %v2313
    %2604 = vmatpush1.bf16.msra.mxu0 %v2312
    %2605 = vmatprep.subr.bf16.mxu0 %v2317
    %2606 = vmatpush1.bf16.msra.mxu0 %v2316
    %2607 = vmatprep.mubr.bf16.mxu0 %v1655
    %2608 = vmatmul.mubr.bf16.gmra.mrb[0].mxu0 %v1654
    %v2609 = vpop.f32.mrb[0].mxu0
    %v2610 = vadd.f32 %v2567, %v2609
    %v2611 = vpop.f32.mrb[0].mxu0
    %v2612 = vadd.f32 %v2569, %v2611
    %v2613 = vpop.f32.mrb[0].mxu0
    %v2614 = vadd.f32 %v2571, %v2613
    %v2615 = vpop.f32.mrb[0].mxu0
    %v2616 = vadd.f32 %v2573, %v2615
    %2617 = vdwg.mxu0
    %v2618 = vmax.f32 %v2524, 0.0
    %v2619 = vmax.f32 %v2526, 0.0
    %v2620 = vmax.f32 %v2610, 0.0
    %v2621 = vmax.f32 %v2612, 0.0
    %v2622 = vmax.f32 %v2528, 0.0
    %v2623 = vmax.f32 %v2530, 0.0
    %v2624 = vmax.f32 %v2614, 0.0
    %v2625 = vmax.f32 %v2616, 0.0
    %v2626 = vpack.c.bf16 %v2622, %v2618
    %v2627 = vpack.c.bf16 %v2623, %v2619
    %v2628 = vpack.c.bf16 %v2624, %v2620
    %v2629 = vpack.c.bf16 %v2625, %v2621
    %v2630 = vld [vmem:[%s5] sm:$0xf]
    %v2631 = vld [vmem:[%s5 + $0x4] sm:$0xf]
    %v2632 = vld [vmem:[%s5 + $0x8] sm:$0xf]
    %v2633 = vld [vmem:[%s5 + $0xc] sm:$0xf]
    %v2634 = vld [vmem:[%s5 + $0x10] sm:$0xf]
    %v2635 = vld [vmem:[%s5 + $0x14] sm:$0xf]
    %v2636 = vld [vmem:[%s5 + $0x18] sm:$0xf]
    %v2637 = vld [vmem:[%s5 + $0x1c] sm:$0xf]
    %v2638 = vld [vmem:[%s5 + $0x20] sm:$0xf]
    %v2639 = vld [vmem:[%s5 + $0x24] sm:$0xf]
    %v2640 = vld [vmem:[%s5 + $0x28] sm:$0xf]
    %v2641 = vld [vmem:[%s5 + $0x2c] sm:$0xf]
    %v2642 = vld [vmem:[%s5 + $0x30] sm:$0xf]
    %v2643 = vld [vmem:[%s5 + $0x34] sm:$0xf]
    %v2644 = vld [vmem:[%s5 + $0x38] sm:$0xf]
    %v2645 = vld [vmem:[%s5 + $0x3c] sm:$0xf]
    %v2646 = vld [vmem:[%s5 + $0x40] sm:$0xf]
    %v2647 = vld [vmem:[%s5 + $0x44] sm:$0xf]
    %v2648 = vld [vmem:[%s5 + $0x48] sm:$0xf]
    %v2649 = vld [vmem:[%s5 + $0x4c] sm:$0xf]
    %v2650 = vld [vmem:[%s5 + $0x50] sm:$0xf]
    %v2651 = vld [vmem:[%s5 + $0x54] sm:$0xf]
    %v2652 = vld [vmem:[%s5 + $0x58] sm:$0xf]
    %v2653 = vld [vmem:[%s5 + $0x5c] sm:$0xf]
    %v2654 = vld [vmem:[%s5 + $0x60] sm:$0xf]
    %v2655 = vld [vmem:[%s5 + $0x64] sm:$0xf]
    %v2656 = vld [vmem:[%s5 + $0x68] sm:$0xf]
    %v2657 = vld [vmem:[%s5 + $0x6c] sm:$0xf]
    %v2658 = vld [vmem:[%s5 + $0x70] sm:$0xf]
    %v2659 = vld [vmem:[%s5 + $0x74] sm:$0xf]
    %v2660 = vld [vmem:[%s5 + $0x78] sm:$0xf]
    %v2661 = vld [vmem:[%s5 + $0x7c] sm:$0xf]
    %v2662 = vld [vmem:[%s5 + $0x80] sm:$0xf]
    %v2663 = vld [vmem:[%s5 + $0x84] sm:$0xf]
    %v2664 = vld [vmem:[%s5 + $0x88] sm:$0xf]
    %v2665 = vld [vmem:[%s5 + $0x8c] sm:$0xf]
    %v2666 = vld [vmem:[%s5 + $0x90] sm:$0xf]
    %v2667 = vld [vmem:[%s5 + $0x94] sm:$0xf]
    %v2668 = vld [vmem:[%s5 + $0x98] sm:$0xf]
    %v2669 = vld [vmem:[%s5 + $0x9c] sm:$0xf]
    %v2670 = vld [vmem:[%s5 + $0xa0] sm:$0xf]
    %v2671 = vld [vmem:[%s5 + $0xa4] sm:$0xf]
    %v2672 = vld [vmem:[%s5 + $0xa8] sm:$0xf]
    %v2673 = vld [vmem:[%s5 + $0xac] sm:$0xf]
    %v2674 = vld [vmem:[%s5 + $0xb0] sm:$0xf]
    %v2675 = vld [vmem:[%s5 + $0xb4] sm:$0xf]
    %v2676 = vld [vmem:[%s5 + $0xb8] sm:$0xf]
    %v2677 = vld [vmem:[%s5 + $0xbc] sm:$0xf]
    %v2678 = vld [vmem:[%s5 + $0xc0] sm:$0xf]
    %v2679 = vld [vmem:[%s5 + $0xc4] sm:$0xf]
    %v2680 = vld [vmem:[%s5 + $0xc8] sm:$0xf]
    %v2681 = vld [vmem:[%s5 + $0xcc] sm:$0xf]
    %v2682 = vld [vmem:[%s5 + $0xd0] sm:$0xf]
    %v2683 = vld [vmem:[%s5 + $0xd4] sm:$0xf]
    %v2684 = vld [vmem:[%s5 + $0xd8] sm:$0xf]
    %v2685 = vld [vmem:[%s5 + $0xdc] sm:$0xf]
    %v2686 = vld [vmem:[%s5 + $0xe0] sm:$0xf]
    %v2687 = vld [vmem:[%s5 + $0xe4] sm:$0xf]
    %v2688 = vld [vmem:[%s5 + $0xe8] sm:$0xf]
    %v2689 = vld [vmem:[%s5 + $0xec] sm:$0xf]
    %v2690 = vld [vmem:[%s5 + $0xf0] sm:$0xf]
    %v2691 = vld [vmem:[%s5 + $0xf4] sm:$0xf]
    %v2692 = vld [vmem:[%s5 + $0xf8] sm:$0xf]
    %v2693 = vld [vmem:[%s5 + $0xfc] sm:$0xf]
    %v2694 = vld [vmem:[%s6] sm:$0x1]
    %v2696 = vlaneseq
    %v2697 = vshrl.u32 %v2696, 7
    %v2698 = vsub.s32 0, %v2697
    %v2699 = vrot.slane %v2694, %v2698
    %v2765 = vunpack.c.l.b16 %v2630
    %v2766 = vunpack.c.l.b16 %v2631
    %v2767 = vunpack.c.l.b16 %v2632
    %v2768 = vunpack.c.l.b16 %v2633
    %v2769 = vunpack.c.l.b16 %v2634
    %v2770 = vunpack.c.l.b16 %v2635
    %v2771 = vunpack.c.l.b16 %v2636
    %v2772 = vunpack.c.l.b16 %v2637
    %v2773 = vunpack.c.l.b16 %v2638
    %v2774 = vunpack.c.l.b16 %v2639
    %v2775 = vunpack.c.l.b16 %v2640
    %v2776 = vunpack.c.l.b16 %v2641
    %v2777 = vunpack.c.l.b16 %v2642
    %v2778 = vunpack.c.l.b16 %v2643
    %v2779 = vunpack.c.l.b16 %v2644
    %v2780 = vunpack.c.l.b16 %v2645
    %v2781 = vunpack.c.l.b16 %v2646
    %v2782 = vunpack.c.l.b16 %v2647
    %v2783 = vunpack.c.l.b16 %v2648
    %v2784 = vunpack.c.l.b16 %v2649
    %v2785 = vunpack.c.l.b16 %v2650
    %v2786 = vunpack.c.l.b16 %v2651
    %v2787 = vunpack.c.l.b16 %v2652
    %v2788 = vunpack.c.l.b16 %v2653
    %v2789 = vunpack.c.l.b16 %v2654
    %v2790 = vunpack.c.l.b16 %v2655
    %v2791 = vunpack.c.l.b16 %v2656
    %v2792 = vunpack.c.l.b16 %v2657
    %v2793 = vunpack.c.l.b16 %v2658
    %v2794 = vunpack.c.l.b16 %v2659
    %v2795 = vunpack.c.l.b16 %v2660
    %v2796 = vunpack.c.l.b16 %v2661
    %v2797 = vunpack.c.l.b16 %v2662
    %v2798 = vunpack.c.l.b16 %v2663
    %v2799 = vunpack.c.l.b16 %v2664
    %v2800 = vunpack.c.l.b16 %v2665
    %v2801 = vunpack.c.l.b16 %v2666
    %v2802 = vunpack.c.l.b16 %v2667
    %v2803 = vunpack.c.l.b16 %v2668
    %v2804 = vunpack.c.l.b16 %v2669
    %v2805 = vunpack.c.l.b16 %v2670
    %v2806 = vunpack.c.l.b16 %v2671
    %v2807 = vunpack.c.l.b16 %v2672
    %v2808 = vunpack.c.l.b16 %v2673
    %v2809 = vunpack.c.l.b16 %v2674
    %v2810 = vunpack.c.l.b16 %v2675
    %v2811 = vunpack.c.l.b16 %v2676
    %v2812 = vunpack.c.l.b16 %v2677
    %v2813 = vunpack.c.l.b16 %v2678
    %v2814 = vunpack.c.l.b16 %v2679
    %v2815 = vunpack.c.l.b16 %v2680
    %v2816 = vunpack.c.l.b16 %v2681
    %v2817 = vunpack.c.l.b16 %v2682
    %v2818 = vunpack.c.l.b16 %v2683
    %v2819 = vunpack.c.l.b16 %v2684
    %v2820 = vunpack.c.l.b16 %v2685
    %v2821 = vunpack.c.l.b16 %v2686
    %v2822 = vunpack.c.l.b16 %v2687
    %v2823 = vunpack.c.l.b16 %v2688
    %v2824 = vunpack.c.l.b16 %v2689
    %v2825 = vunpack.c.l.b16 %v2690
    %v2826 = vunpack.c.l.b16 %v2691
    %v2827 = vunpack.c.l.b16 %v2692
    %v2828 = vunpack.c.l.b16 %v2693
    %v2829 = vpack.c.b16 %v2766, %v2765
    %v2830 = vpack.c.b16 %v2768, %v2767
    %v2831 = vpack.c.b16 %v2770, %v2769
    %v2832 = vpack.c.b16 %v2772, %v2771
    %v2833 = vpack.c.b16 %v2774, %v2773
    %v2834 = vpack.c.b16 %v2776, %v2775
    %v2835 = vpack.c.b16 %v2778, %v2777
    %v2836 = vpack.c.b16 %v2780, %v2779
    %v2837 = vpack.c.b16 %v2782, %v2781
    %v2838 = vpack.c.b16 %v2784, %v2783
    %v2839 = vpack.c.b16 %v2786, %v2785
    %v2840 = vpack.c.b16 %v2788, %v2787
    %v2841 = vpack.c.b16 %v2790, %v2789
    %v2842 = vpack.c.b16 %v2792, %v2791
    %v2843 = vpack.c.b16 %v2794, %v2793
    %v2844 = vpack.c.b16 %v2796, %v2795
    %v2845 = vpack.c.b16 %v2798, %v2797
    %v2846 = vpack.c.b16 %v2800, %v2799
    %v2847 = vpack.c.b16 %v2802, %v2801
    %v2848 = vpack.c.b16 %v2804, %v2803
    %v2849 = vpack.c.b16 %v2806, %v2805
    %v2850 = vpack.c.b16 %v2808, %v2807
    %v2851 = vpack.c.b16 %v2810, %v2809
    %v2852 = vpack.c.b16 %v2812, %v2811
    %v2853 = vpack.c.b16 %v2814, %v2813
    %v2854 = vpack.c.b16 %v2816, %v2815
    %v2855 = vpack.c.b16 %v2818, %v2817
    %v2856 = vpack.c.b16 %v2820, %v2819
    %v2857 = vpack.c.b16 %v2822, %v2821
    %v2858 = vpack.c.b16 %v2824, %v2823
    %v2859 = vpack.c.b16 %v2826, %v2825
    %v2860 = vpack.c.b16 %v2828, %v2827
    %2893 = vmatprep.subr.bf16.mxu0 0
    %2894 = vmatpush1.bf16.msra.mxu0 %v2829
    %2895 = vmatprep.subr.bf16.mxu0 0
    %2896 = vmatpush1.bf16.msra.mxu0 %v2830
    %2897 = vmatprep.subr.bf16.mxu0 0
    %2898 = vmatpush1.bf16.msra.mxu0 %v2831
    %2899 = vmatprep.subr.bf16.mxu0 0
    %2900 = vmatpush1.bf16.msra.mxu0 %v2832
    %2901 = vmatprep.subr.bf16.mxu0 0
    %2902 = vmatpush1.bf16.msra.mxu0 %v2833
    %2903 = vmatprep.subr.bf16.mxu0 0
    %2904 = vmatpush1.bf16.msra.mxu0 %v2834
    %2905 = vmatprep.subr.bf16.mxu0 0
    %2906 = vmatpush1.bf16.msra.mxu0 %v2835
    %2907 = vmatprep.subr.bf16.mxu0 0
    %2908 = vmatpush1.bf16.msra.mxu0 %v2836
    %2909 = vmatprep.subr.bf16.mxu0 0
    %2910 = vmatpush1.bf16.msra.mxu0 %v2837
    %2911 = vmatprep.subr.bf16.mxu0 0
    %2912 = vmatpush1.bf16.msra.mxu0 %v2838
    %2913 = vmatprep.subr.bf16.mxu0 0
    %2914 = vmatpush1.bf16.msra.mxu0 %v2839
    %2915 = vmatprep.subr.bf16.mxu0 0
    %2916 = vmatpush1.bf16.msra.mxu0 %v2840
    %2917 = vmatprep.subr.bf16.mxu0 0
    %2918 = vmatpush1.bf16.msra.mxu0 %v2841
    %2919 = vmatprep.subr.bf16.mxu0 0
    %2920 = vmatpush1.bf16.msra.mxu0 %v2842
    %2921 = vmatprep.subr.bf16.mxu0 0
    %2922 = vmatpush1.bf16.msra.mxu0 %v2843
    %2923 = vmatprep.subr.bf16.mxu0 0
    %2924 = vmatpush1.bf16.msra.mxu0 %v2844
    %2925 = vmatprep.mubr.bf16.mxu0 %v2627
    %2926 = vmatmul.mubr.bf16.gmra.mrb[0].mxu0 %v2626
    %v2927 = vpop.f32.mrb[0].mxu0
    %v2928 = vadd.f32 %v2699, %v2927
    %v2929 = vpop.f32.mrb[0].mxu0
    %v2930 = vpop.f32.mrb[0].mxu0
    %v2931 = vadd.f32 %v2699, %v2930
    %v2932 = vpop.f32.mrb[0].mxu0
    %2933 = vdwg.mxu0
    %2934 = vmatprep.subr.bf16.mxu0 0
    %2935 = vmatpush1.bf16.msra.mxu0 %v2845
    %2936 = vmatprep.subr.bf16.mxu0 0
    %2937 = vmatpush1.bf16.msra.mxu0 %v2846
    %2938 = vmatprep.subr.bf16.mxu0 0
    %2939 = vmatpush1.bf16.msra.mxu0 %v2847
    %2940 = vmatprep.subr.bf16.mxu0 0
    %2941 = vmatpush1.bf16.msra.mxu0 %v2848
    %2942 = vmatprep.subr.bf16.mxu0 0
    %2943 = vmatpush1.bf16.msra.mxu0 %v2849
    %2944 = vmatprep.subr.bf16.mxu0 0
    %2945 = vmatpush1.bf16.msra.mxu0 %v2850
    %2946 = vmatprep.subr.bf16.mxu0 0
    %2947 = vmatpush1.bf16.msra.mxu0 %v2851
    %2948 = vmatprep.subr.bf16.mxu0 0
    %2949 = vmatpush1.bf16.msra.mxu0 %v2852
    %2950 = vmatprep.subr.bf16.mxu0 0
    %2951 = vmatpush1.bf16.msra.mxu0 %v2853
    %2952 = vmatprep.subr.bf16.mxu0 0
    %2953 = vmatpush1.bf16.msra.mxu0 %v2854
    %2954 = vmatprep.subr.bf16.mxu0 0
    %2955 = vmatpush1.bf16.msra.mxu0 %v2855
    %2956 = vmatprep.subr.bf16.mxu0 0
    %2957 = vmatpush1.bf16.msra.mxu0 %v2856
    %2958 = vmatprep.subr.bf16.mxu0 0
    %2959 = vmatpush1.bf16.msra.mxu0 %v2857
    %2960 = vmatprep.subr.bf16.mxu0 0
    %2961 = vmatpush1.bf16.msra.mxu0 %v2858
    %2962 = vmatprep.subr.bf16.mxu0 0
    %2963 = vmatpush1.bf16.msra.mxu0 %v2859
    %2964 = vmatprep.subr.bf16.mxu0 0
    %2965 = vmatpush1.bf16.msra.mxu0 %v2860
    %2966 = vmatprep.mubr.bf16.mxu0 %v2629
    %2967 = vmatmul.mubr.bf16.gmra.mrb[0].mxu0 %v2628
    %v2968 = vpop.f32.mrb[0].mxu0
    %v2969 = vadd.f32 %v2928, %v2968
    %v2970 = vpop.f32.mrb[0].mxu0
    %v2971 = vpop.f32.mrb[0].mxu0
    %v2972 = vadd.f32 %v2931, %v2971
    %v2973 = vpop.f32.mrb[0].mxu0
    %2974 = vdwg.mxu0
    %2975 = vst [vmem:[%s7] sm:$0xff] %v2969
    %2976 = vst [vmem:[%s7 + $0x8] sm:$0xff] %v2972
    // Predicated region
    $region38: #{neural_network_forward.1} parent=1 // pred_check
      _
    $region39: #{neural_network_forward.1} parent=1 // pred_check_branch
      %2978 = sbr.rel (0) target = $region41
    $region40: #{neural_network_forward.1} parent=1 // pred_region
      _
    $region41: #{neural_network_forward.1} parent=1 // pred_fallthru
      _
    // Predicated region
    $region42: #{neural_network_forward.1} parent=1 // pred_check
      _
    $region43: #{neural_network_forward.1} parent=1 // pred_check_branch
      %2980 = sbr.rel (0) target = $region45
    $region44: #{neural_network_forward.1} parent=1 // pred_region
      _
    $region45: #{neural_network_forward.1} parent=1 // pred_fallthru
      _
    %2981 = vsyncpa [#allocation3], 1
    %2982 = vsyncpa [#allocation5], 1

</llo_original>
